<compile_context>
chip_gen: v7x
topology: tpu7x:2x2x1
jax: 0.10.0
libtpu: 0.0.40
codegen_flags: <defaults>
</compile_context>

<pallas_src>
import functools

import numpy as np
import jax
import jax.numpy as jnp
from jax.experimental import pallas as pl
from jax.experimental.pallas import tpu as pltpu


# --------------------------------------------------------------------------------------
# Fused Pallas kernel: the entire FMEncoder forward in one VMEM-resident pass
# --------------------------------------------------------------------------------------

def _fused_fm_encoder_kernel(
    # graph operators / node features
    x_prot_ref, x_drug_ref, a_pp_ref, m_dp_ref, a_dd_ref,
    # PPEncoder params
    gcn1_w_ref, gcn1_b_ref, gcn2_w_ref, gcn2_b_ref,
    # hierarchy conv + drug embedding
    hgcn_w_ref, embed_ref,
    # RGCN params (relation weights already basis-combined; layer-2 padded to 128 lanes)
    w1_ref, root1_ref, w2_ref, root2_ref,
    # output (D, n_hid2_pad) - lane dense
    o_ref,
    # scratch: concatenated drug features (D, n_embed + prot_drug_dim)
    xcat_ref,
    *, compute_dtype):
    f32 = jnp.float32
    n_embed = embed_ref.shape[1]
    num_drug = x_drug_ref.shape[0]
    num_rel = w1_ref.shape[0]

    def mm(a, b):
        return jnp.dot(a.astype(compute_dtype), b.astype(compute_dtype),
                       preferred_element_type=f32)

    # ---- PPEncoder: GCNConv -> ReLU -> GCNConv        (GCN(x) = A_norm @ (x @ W) + b) ----
    h = mm(x_prot_ref[...], gcn1_w_ref[...])
    h = jnp.maximum(mm(a_pp_ref[...], h) + gcn1_b_ref[...], 0.0)
    h = mm(h, gcn2_w_ref[...])
    x_p = mm(a_pp_ref[...], h) + gcn2_b_ref[...]                       # (P, pp_hid2)

    # ---- MyHierarchyConv: mean-aggregate prot features onto drugs, then linear ----
    x_pd = mm(mm(m_dp_ref[...], x_p), hgcn_w_ref[...])                 # (D, prot_drug_dim)

    # ---- drug embedding ----
    xd = mm(x_drug_ref[...], embed_ref[...])                           # (D, n_embed)

    # ---- 'cat' fusion: materialize [xd | x_pd] once in VMEM scratch ----
    xcat_ref[:, :n_embed] = xd
    xcat_ref[:, n_embed:] = x_pd
    x_cat = xcat_ref[...]                                              # (D, rgcn_in)

    # ---- MyRGCNConv2 #1 (ReLU fused) ----
    # One big matmul against the vstacked (deg_inv-scaled) relational adjacency:
    #   y1[r*D:(r+1)*D] == A_scaled[r] @ x_cat
    y1 = mm(a_dd_ref[...], x_cat)                                      # (R*D, rgcn_in)
    acc = mm(x_cat, root1_ref[...])                                    # root term
    for r in range(num_rel):                                           # R is small; static unroll
        acc = acc + mm(y1[r * num_drug:(r + 1) * num_drug, :], w1_ref[r])
    h1 = jnp.maximum(acc, 0.0)                                         # (D, n_hid1)

    # ---- MyRGCNConv2 #2 (output lanes padded to 128 -> unmasked lane-dense store) ----
    y2 = mm(a_dd_ref[...], h1)                                         # (R*D, n_hid1)
    acc2 = mm(h1, root2_ref[...])
    for r in range(num_rel):
        acc2 = acc2 + mm(y2[r * num_drug:(r + 1) * num_drug, :], w2_ref[r])
    o_ref[...] = acc2.astype(o_ref.dtype)                              # (D, n_hid2_pad)


def fm_encoder_forward(params, x_drug, x_prot, A_pp, M_dp, A_dd_scaled,
                       *, compute_dtype=jnp.bfloat16):
    """Fused FMEncoder forward. A_dd_scaled is the per-relation adjacency with the
    total-in-degree mean normaliser (deg_inv) already folded into its rows."""
    R, D, _ = A_dd_scaled.shape
    n_embed = params["embed"].shape[1]
    prot_drug_dim = params["hgcn_w"].shape[1]
    rgcn_in = n_embed + prot_drug_dim
    n_hid2 = params["rgcn2_root"].shape[1]
    n_hid2_pad = ((n_hid2 + 127) // 128) * 128     # lane-dense output slab
    pad_cols = n_hid2_pad - n_hid2

    # tiny basis-combination matmuls: plain JAX (XLA fuses them; no kernel launch needed)
    def rel_weights(att, basis):
        B = basis.shape[0]
        return (att @ basis.reshape(B, -1)).reshape(att.shape[0],
                                                    basis.shape[1], basis.shape[2])

    w1 = rel_weights(params["rgcn1_att"], params["rgcn1_basis"])   # (R, rgcn_in, n_hid1)
    w2 = rel_weights(params["rgcn2_att"], params["rgcn2_basis"])   # (R, n_hid1, n_hid2)
    w2 = jnp.pad(w2, ((0, 0), (0, 0), (0, pad_cols)))              # (R, n_hid1, n_hid2_pad)
    root2 = jnp.pad(params["rgcn2_root"], ((0, 0), (0, pad_cols)))  # (n_hid1, n_hid2_pad)

    # vstack relational adjacency: (R, D, D) -> (R*D, D) so RGCN aggregation is one matmul
    A_vstack = A_dd_scaled.reshape(R * D, D)

    # heavy graph operands / features at compute precision (halves VMEM in the bf16 path)
    gd = compute_dtype
    inputs = (
        x_prot.astype(gd), x_drug.astype(gd),
        A_pp.astype(gd), M_dp.astype(gd), A_vstack.astype(gd),
        params["gcn1_w"], params["gcn1_b"].reshape(1, -1),
        params["gcn2_w"], params["gcn2_b"].reshape(1, -1),
        params["hgcn_w"], params["embed"],
        w1, params["rgcn1_root"], w2, root2,
    )

    # explicit scoped-VMEM limit with headroom (inputs + output + scratch, x2)
    in_bytes = sum(int(np.prod(a.shape)) * jnp.dtype(a.dtype).itemsize for a in inputs)
    total_bytes = in_bytes + D * n_hid2_pad * 4 + D * rgcn_in * 4
    vmem_limit = int(min(64 * 1024 * 1024, max(32 * 1024 * 1024, 2 * total_bytes)))

    kernel = functools.partial(_fused_fm_encoder_kernel, compute_dtype=compute_dtype)
    vmem = pl.BlockSpec(memory_space=pltpu.MemorySpace.VMEM)
    out_full = pl.pallas_call(
        kernel,
        out_shape=jax.ShapeDtypeStruct((D, n_hid2_pad), jnp.float32),
        in_specs=[vmem] * len(inputs),
        out_specs=vmem,
        scratch_shapes=[pltpu.VMEM((D, rgcn_in), jnp.float32)],
        compiler_params=pltpu.CompilerParams(vmem_limit_bytes=vmem_limit),
    )(*inputs)
    return out_full[:, :n_hid2]


# --------------------------------------------------------------------------------------
# Glue: dense graph-operator construction (from edge_index, as in the PyTorch module)
# --------------------------------------------------------------------------------------

def build_gcn_norm_adj(edge_index, num_nodes):
    """GCNConv normalisation: D^-1/2 (A + I) D^-1/2 with in-degree based deg."""
    src, tgt = edge_index[0], edge_index[1]
    A = jnp.zeros((num_nodes, num_nodes), jnp.float32).at[tgt, src].add(1.0)
    A = A + jnp.eye(num_nodes, dtype=jnp.float32)
    deg = A.sum(axis=1)
    dis = jax.lax.rsqrt(deg)
    return dis[:, None] * A * dis[None, :]


def build_mean_agg(src, tgt, num_tgt, num_src):
    """Row-stochastic mean-aggregation matrix (scatter_mean equivalent)."""
    C = jnp.zeros((num_tgt, num_src), jnp.float32).at[tgt, src].add(1.0)
    deg = C.sum(axis=1, keepdims=True)
    return jnp.where(deg > 0, C / jnp.maximum(deg, 1.0), 0.0)


def build_relational_adj(dd_edge_index, dd_range_list, num_rel, num_nodes):
    """Per-relation (target, source) count matrices + global mean normaliser."""
    A = jnp.zeros((num_rel, num_nodes, num_nodes), jnp.float32)
    for et in range(num_rel):
        s, e = int(dd_range_list[et, 0]), int(dd_range_list[et, 1])
        src = dd_edge_index[0, s:e]
        tgt = dd_edge_index[1, s:e]
        A = A.at[et, tgt, src].add(1.0)
    deg = A.sum(axis=(0, 2))                       # total in-degree across all relations
    deg_inv = jnp.where(deg > 0, 1.0 / deg, 0.0)[:, None]
    A_scaled = A * deg_inv[None, :, :]             # fold mean normaliser into adjacency rows
    return A, A_scaled, deg_inv


# --------------------------------------------------------------------------------------
# Pure-JAX reference (mirrors the PyTorch semantics)
# --------------------------------------------------------------------------------------

def fm_encoder_reference(params, x_drug, x_prot, A_pp, M_dp, A_dd, deg_inv_dd):
    h = jnp.maximum(A_pp @ (x_prot @ params["gcn1_w"]) + params["gcn1_b"], 0.0)
    x_p = A_pp @ (h @ params["gcn2_w"]) + params["gcn2_b"]
    x_pd = (M_dp @ x_p) @ params["hgcn_w"]
    xd = x_drug @ params["embed"]
    x = jnp.concatenate([xd, x_pd], axis=1)

    def rgcn(xin, att, basis, root, relu):
        R, B = att.shape[0], basis.shape[0]
        w = (att @ basis.reshape(B, -1)).reshape(R, xin.shape[1], -1)
        agg = jnp.zeros((xin.shape[0], root.shape[1]), jnp.float32)
        for et in range(R):
            agg = agg + A_dd[et] @ xin @ w[et]
        out = deg_inv_dd * agg + xin @ root
        return jnp.maximum(out, 0.0) if relu else out

    h2 = rgcn(x, params["rgcn1_att"], params["rgcn1_basis"], params["rgcn1_root"], True)
    return rgcn(h2, params["rgcn2_att"], params["rgcn2_basis"], params["rgcn2_root"], False)


# --------------------------------------------------------------------------------------
# Main
# --------------------------------------------------------------------------------------

if __name__ == "__main__":
    # Small-but-consistent hyper-parameters (mirroring FMEncoder.__init__ shapes)
    in_dim_drug = 10
    num_dd_et = 3         # number of drug-drug edge types (relations)
    in_dim_prot = 12
    uni_num_prot = 16     # P
    uni_num_drug = 8      # D
    prot_drug_dim = 16
    num_base = 4
    n_embed = 16
    n_hid1 = 8
    n_hid2 = 4
    pp_hid1, pp_hid2 = 32, 16  # PPEncoder defaults
    rgcn_in = n_embed + prot_drug_dim  # mod == 'cat'

    key = jax.random.PRNGKey(0)
    ks = jax.random.split(key, 20)

    # ---- deterministic parameters (shapes per the PyTorch __init__ / reset_parameters) ----
    params = {
        "gcn1_w": jax.random.normal(ks[0], (in_dim_prot, pp_hid1)) / np.sqrt(in_dim_prot),
        "gcn1_b": jnp.zeros((pp_hid1,), jnp.float32),
        "gcn2_w": jax.random.normal(ks[1], (pp_hid1, pp_hid2)) / np.sqrt(pp_hid1),
        "gcn2_b": jnp.zeros((pp_hid2,), jnp.float32),
        "embed": jax.random.normal(ks[2], (in_dim_drug, n_embed)),
        "hgcn_w": jax.random.normal(ks[3], (pp_hid2, prot_drug_dim)) / np.sqrt(pp_hid2),
        "rgcn1_basis": jax.random.normal(ks[4], (num_base, rgcn_in, n_hid1)) / np.sqrt(rgcn_in),
        "rgcn1_att": jax.random.normal(ks[5], (num_dd_et, num_base)) / np.sqrt(num_base),
        "rgcn1_root": jax.random.normal(ks[6], (rgcn_in, n_hid1)) / np.sqrt(rgcn_in),
        "rgcn2_basis": jax.random.normal(ks[7], (num_base, n_hid1, n_hid2)) * (2.0 / n_hid1),
        "rgcn2_att": jax.random.normal(ks[8], (num_dd_et, num_base)) / np.sqrt(num_base),
        "rgcn2_root": jax.random.normal(ks[9], (n_hid1, n_hid2)) * (2.0 / n_hid1),
    }
    params = jax.tree_util.tree_map(lambda a: a.astype(jnp.float32), params)

    # ---- deterministic synthetic graph inputs ----
    x_prot = jax.random.normal(ks[10], (uni_num_prot, in_dim_prot), jnp.float32)
    x_drug = jax.random.normal(ks[11], (uni_num_drug, in_dim_drug), jnp.float32)

    # protein-protein edges
    E_pp = 48
    pp_edge_index = jnp.stack([
        jax.random.randint(ks[12], (E_pp,), 0, uni_num_prot),
        jax.random.randint(ks[13], (E_pp,), 0, uni_num_prot)])

    # drug-drug edges, grouped (sorted) by edge type, with range_list
    E_per_type = 10
    dd_src = jax.random.randint(ks[14], (num_dd_et * E_per_type,), 0, uni_num_drug)
    dd_tgt = jax.random.randint(ks[15], (num_dd_et * E_per_type,), 0, uni_num_drug)
    dd_edge_index = jnp.stack([dd_src, dd_tgt])
    dd_range_list = jnp.stack([jnp.arange(num_dd_et) * E_per_type,
                               (jnp.arange(num_dd_et) + 1) * E_per_type], axis=1)

    # drug-protein edges (prot node -> drug node, drug index offset by uni_num_prot)
    E_dp = 20
    dp_src = jax.random.randint(ks[16], (E_dp,), 0, uni_num_prot)
    dp_tgt = jax.random.randint(ks[17], (E_dp,), uni_num_prot, uni_num_prot + uni_num_drug)
    dp_edge_index = jnp.stack([dp_src, dp_tgt])

    # ---- dense graph operators (glue) ----
    A_pp = build_gcn_norm_adj(pp_edge_index, uni_num_prot)                      # (P, P)
    M_dp = build_mean_agg(dp_edge_index[0], dp_edge_index[1] - uni_num_prot,
                          uni_num_drug, uni_num_prot)                           # (D, P)
    A_dd, A_dd_scaled, deg_inv_dd = build_relational_adj(
        dd_edge_index, np.asarray(dd_range_list), num_dd_et, uni_num_drug)      # (R,D,D)

    # ---- pure-JAX reference ----
    ref = fm_encoder_reference(params, x_drug, x_prot, A_pp, M_dp, A_dd, deg_inv_dd)
    jax.block_until_ready(ref)

    # ---- fused Pallas forward, f32 path: strict numerical verification ----
    fwd_f32 = jax.jit(functools.partial(fm_encoder_forward, compute_dtype=jnp.float32))
    out = fwd_f32(params, x_drug, x_prot, A_pp, M_dp, A_dd_scaled)
    jax.block_until_ready(out)
    assert out.shape == (uni_num_drug, n_hid2), out.shape
    np.testing.assert_allclose(np.asarray(out), np.asarray(ref), rtol=2e-3, atol=2e-3)

    # ---- production bf16 path (f32 accumulation): run + sanity-check ----
    fwd_bf16 = jax.jit(fm_encoder_forward)   # default compute_dtype=bf16
    out_bf16 = fwd_bf16(params, x_drug, x_prot, A_pp, M_dp, A_dd_scaled)
    jax.block_until_ready(out_bf16)
    assert out_bf16.shape == (uni_num_drug, n_hid2)
    assert bool(jnp.all(jnp.isfinite(out_bf16)))

    print("KERNEL_OK")
</pallas_src>

<mosaic_0001>
module attributes {stable_mosaic.version = 11 : i64} {
  func.func @_fused_fm_encoder_kernel(%arg0: memref<16x12xf32, #tpu.memory_space<vmem>>, %arg1: memref<8x10xf32, #tpu.memory_space<vmem>>, %arg2: memref<16x16xf32, #tpu.memory_space<vmem>>, %arg3: memref<8x16xf32, #tpu.memory_space<vmem>>, %arg4: memref<24x8xf32, #tpu.memory_space<vmem>>, %arg5: memref<12x32xf32, #tpu.memory_space<vmem>>, %arg6: memref<1x32xf32, #tpu.memory_space<vmem>>, %arg7: memref<32x16xf32, #tpu.memory_space<vmem>>, %arg8: memref<1x16xf32, #tpu.memory_space<vmem>>, %arg9: memref<16x16xf32, #tpu.memory_space<vmem>>, %arg10: memref<10x16xf32, #tpu.memory_space<vmem>>, %arg11: memref<3x32x8xf32, #tpu.memory_space<vmem>>, %arg12: memref<32x8xf32, #tpu.memory_space<vmem>>, %arg13: memref<3x8x128xf32, #tpu.memory_space<vmem>>, %arg14: memref<8x128xf32, #tpu.memory_space<vmem>>, %arg15: memref<8x128xf32, #tpu.memory_space<vmem>>, %arg16: memref<8x32xf32, #tpu.memory_space<vmem>>) attributes {dimension_semantics = [], scalar_prefetch = 0 : i64, scratch_operands = 1 : i64, tpu.core_type = #tpu.core_type<tc>} {
    %c0 = arith.constant 0 : index
    %c0_0 = arith.constant 0 : index
    %0 = vector.load %arg0[%c0, %c0_0] : memref<16x12xf32, #tpu.memory_space<vmem>>, vector<16x12xf32>
    %c0_1 = arith.constant 0 : index
    %c0_2 = arith.constant 0 : index
    %1 = vector.load %arg5[%c0_1, %c0_2] : memref<12x32xf32, #tpu.memory_space<vmem>>, vector<12x32xf32>
    %cst = arith.constant dense<0.000000e+00> : vector<16x32xf32>
    %2 = tpu.matmul %0, %1, %cst {dimension_numbers = #tpu.dot_dimension_numbers<[1], [0], [0], [1], [0, 0, 1, 1], [], []>} : vector<16x12xf32>, vector<12x32xf32>, vector<16x32xf32> -> vector<16x32xf32>
    %c0_3 = arith.constant 0 : index
    %c0_4 = arith.constant 0 : index
    %3 = vector.load %arg2[%c0_3, %c0_4] : memref<16x16xf32, #tpu.memory_space<vmem>>, vector<16x16xf32>
    %cst_5 = arith.constant dense<0.000000e+00> : vector<16x32xf32>
    %4 = tpu.matmul %3, %2, %cst_5 {dimension_numbers = #tpu.dot_dimension_numbers<[1], [0], [0], [1], [0, 0, 1, 1], [], []>} : vector<16x16xf32>, vector<16x32xf32>, vector<16x32xf32> -> vector<16x32xf32>
    %c0_6 = arith.constant 0 : index
    %c0_7 = arith.constant 0 : index
    %5 = vector.load %arg6[%c0_6, %c0_7] : memref<1x32xf32, #tpu.memory_space<vmem>>, vector<1x32xf32>
    %6 = vector.broadcast %5 : vector<1x32xf32> to vector<16x32xf32>
    %7 = arith.addf %4, %6 : vector<16x32xf32>
    %cst_8 = arith.constant 0.000000e+00 : f32
    %8 = vector.broadcast %cst_8 : f32 to vector<16x32xf32>
    %9 = arith.maximumf %7, %8 : vector<16x32xf32>
    %c0_9 = arith.constant 0 : index
    %c0_10 = arith.constant 0 : index
    %10 = vector.load %arg7[%c0_9, %c0_10] : memref<32x16xf32, #tpu.memory_space<vmem>>, vector<32x16xf32>
    %cst_11 = arith.constant dense<0.000000e+00> : vector<16x16xf32>
    %11 = tpu.matmul %9, %10, %cst_11 {dimension_numbers = #tpu.dot_dimension_numbers<[1], [0], [0], [1], [0, 0, 1, 1], [], []>} : vector<16x32xf32>, vector<32x16xf32>, vector<16x16xf32> -> vector<16x16xf32>
    %c0_12 = arith.constant 0 : index
    %c0_13 = arith.constant 0 : index
    %12 = vector.load %arg2[%c0_12, %c0_13] : memref<16x16xf32, #tpu.memory_space<vmem>>, vector<16x16xf32>
    %cst_14 = arith.constant dense<0.000000e+00> : vector<16x16xf32>
    %13 = tpu.matmul %12, %11, %cst_14 {dimension_numbers = #tpu.dot_dimension_numbers<[1], [0], [0], [1], [0, 0, 1, 1], [], []>} : vector<16x16xf32>, vector<16x16xf32>, vector<16x16xf32> -> vector<16x16xf32>
    %c0_15 = arith.constant 0 : index
    %c0_16 = arith.constant 0 : index
    %14 = vector.load %arg8[%c0_15, %c0_16] : memref<1x16xf32, #tpu.memory_space<vmem>>, vector<1x16xf32>
    %15 = vector.broadcast %14 : vector<1x16xf32> to vector<16x16xf32>
    %16 = arith.addf %13, %15 : vector<16x16xf32>
    %c0_17 = arith.constant 0 : index
    %c0_18 = arith.constant 0 : index
    %17 = vector.load %arg3[%c0_17, %c0_18] : memref<8x16xf32, #tpu.memory_space<vmem>>, vector<8x16xf32>
    %cst_19 = arith.constant dense<0.000000e+00> : vector<8x16xf32>
    %18 = tpu.matmul %17, %16, %cst_19 {dimension_numbers = #tpu.dot_dimension_numbers<[1], [0], [0], [1], [0, 0, 1, 1], [], []>} : vector<8x16xf32>, vector<16x16xf32>, vector<8x16xf32> -> vector<8x16xf32>
    %c0_20 = arith.constant 0 : index
    %c0_21 = arith.constant 0 : index
    %19 = vector.load %arg9[%c0_20, %c0_21] : memref<16x16xf32, #tpu.memory_space<vmem>>, vector<16x16xf32>
    %cst_22 = arith.constant dense<0.000000e+00> : vector<8x16xf32>
    %20 = tpu.matmul %18, %19, %cst_22 {dimension_numbers = #tpu.dot_dimension_numbers<[1], [0], [0], [1], [0, 0, 1, 1], [], []>} : vector<8x16xf32>, vector<16x16xf32>, vector<8x16xf32> -> vector<8x16xf32>
    %c0_23 = arith.constant 0 : index
    %c0_24 = arith.constant 0 : index
    %21 = vector.load %arg1[%c0_23, %c0_24] : memref<8x10xf32, #tpu.memory_space<vmem>>, vector<8x10xf32>
    %c0_25 = arith.constant 0 : index
    %c0_26 = arith.constant 0 : index
    %22 = vector.load %arg10[%c0_25, %c0_26] : memref<10x16xf32, #tpu.memory_space<vmem>>, vector<10x16xf32>
    %cst_27 = arith.constant dense<0.000000e+00> : vector<8x16xf32>
    %23 = tpu.matmul %21, %22, %cst_27 {dimension_numbers = #tpu.dot_dimension_numbers<[1], [0], [0], [1], [0, 0, 1, 1], [], []>} : vector<8x10xf32>, vector<10x16xf32>, vector<8x16xf32> -> vector<8x16xf32>
    %c0_28 = arith.constant 0 : index
    %c0_29 = arith.constant 0 : index
    %24 = vector.load %arg16[%c0_28, %c0_29] : memref<8x32xf32, #tpu.memory_space<vmem>>, vector<8x16xf32>
    tpu.vector_store %arg16[%c0_28, %c0_29], %23 {strides = array<i32>} : memref<8x32xf32, #tpu.memory_space<vmem>>, vector<8x16xf32>,
    %c0_30 = arith.constant 0 : index
    %c16 = arith.constant 16 : index
    %25 = vector.load %arg16[%c0_30, %c16] : memref<8x32xf32, #tpu.memory_space<vmem>>, vector<8x16xf32>
    tpu.vector_store %arg16[%c0_30, %c16], %20 {strides = array<i32>} : memref<8x32xf32, #tpu.memory_space<vmem>>, vector<8x16xf32>,
    %c0_31 = arith.constant 0 : index
    %c0_32 = arith.constant 0 : index
    %26 = vector.load %arg16[%c0_31, %c0_32] : memref<8x32xf32, #tpu.memory_space<vmem>>, vector<8x32xf32>
    %c0_33 = arith.constant 0 : index
    %c0_34 = arith.constant 0 : index
    %27 = vector.load %arg4[%c0_33, %c0_34] : memref<24x8xf32, #tpu.memory_space<vmem>>, vector<24x8xf32>
    %cst_35 = arith.constant dense<0.000000e+00> : vector<24x32xf32>
    %28 = tpu.matmul %27, %26, %cst_35 {dimension_numbers = #tpu.dot_dimension_numbers<[1], [0], [0], [1], [0, 0, 1, 1], [], []>} : vector<24x8xf32>, vector<8x32xf32>, vector<24x32xf32> -> vector<24x32xf32>
    %c0_36 = arith.constant 0 : index
    %c0_37 = arith.constant 0 : index
    %29 = vector.load %arg12[%c0_36, %c0_37] : memref<32x8xf32, #tpu.memory_space<vmem>>, vector<32x8xf32>
    %cst_38 = arith.constant dense<0.000000e+00> : vector<8x8xf32>
    %30 = tpu.matmul %26, %29, %cst_38 {dimension_numbers = #tpu.dot_dimension_numbers<[1], [0], [0], [1], [0, 0, 1, 1], [], []>} : vector<8x32xf32>, vector<32x8xf32>, vector<8x8xf32> -> vector<8x8xf32>
    %31 = vector.extract_strided_slice %28 {offsets = [0, 0], sizes = [8, 32], strides = [1, 1]} : vector<24x32xf32> to vector<8x32xf32>
    %c0_39 = arith.constant 0 : index
    %c0_40 = arith.constant 0 : index
    %c0_41 = arith.constant 0 : index
    %32 = vector.load %arg11[%c0_39, %c0_40, %c0_41] : memref<3x32x8xf32, #tpu.memory_space<vmem>>, vector<1x32x8xf32>
    %33 = vector.shape_cast %32 : vector<1x32x8xf32> to vector<32x8xf32>
    %cst_42 = arith.constant dense<0.000000e+00> : vector<8x8xf32>
    %34 = tpu.matmul %31, %33, %cst_42 {dimension_numbers = #tpu.dot_dimension_numbers<[1], [0], [0], [1], [0, 0, 1, 1], [], []>} : vector<8x32xf32>, vector<32x8xf32>, vector<8x8xf32> -> vector<8x8xf32>
    %35 = arith.addf %30, %34 : vector<8x8xf32>
    %36 = vector.extract_strided_slice %28 {offsets = [8, 0], sizes = [8, 32], strides = [1, 1]} : vector<24x32xf32> to vector<8x32xf32>
    %c1 = arith.constant 1 : index
    %c0_43 = arith.constant 0 : index
    %c0_44 = arith.constant 0 : index
    %37 = vector.load %arg11[%c1, %c0_43, %c0_44] : memref<3x32x8xf32, #tpu.memory_space<vmem>>, vector<1x32x8xf32>
    %38 = vector.shape_cast %37 : vector<1x32x8xf32> to vector<32x8xf32>
    %cst_45 = arith.constant dense<0.000000e+00> : vector<8x8xf32>
    %39 = tpu.matmul %36, %38, %cst_45 {dimension_numbers = #tpu.dot_dimension_numbers<[1], [0], [0], [1], [0, 0, 1, 1], [], []>} : vector<8x32xf32>, vector<32x8xf32>, vector<8x8xf32> -> vector<8x8xf32>
    %40 = arith.addf %35, %39 : vector<8x8xf32>
    %41 = vector.extract_strided_slice %28 {offsets = [16, 0], sizes = [8, 32], strides = [1, 1]} : vector<24x32xf32> to vector<8x32xf32>
    %c2 = arith.constant 2 : index
    %c0_46 = arith.constant 0 : index
    %c0_47 = arith.constant 0 : index
    %42 = vector.load %arg11[%c2, %c0_46, %c0_47] : memref<3x32x8xf32, #tpu.memory_space<vmem>>, vector<1x32x8xf32>
    %43 = vector.shape_cast %42 : vector<1x32x8xf32> to vector<32x8xf32>
    %cst_48 = arith.constant dense<0.000000e+00> : vector<8x8xf32>
    %44 = tpu.matmul %41, %43, %cst_48 {dimension_numbers = #tpu.dot_dimension_numbers<[1], [0], [0], [1], [0, 0, 1, 1], [], []>} : vector<8x32xf32>, vector<32x8xf32>, vector<8x8xf32> -> vector<8x8xf32>
    %45 = arith.addf %40, %44 : vector<8x8xf32>
    %cst_49 = arith.constant 0.000000e+00 : f32
    %46 = vector.broadcast %cst_49 : f32 to vector<8x8xf32>
    %47 = arith.maximumf %45, %46 : vector<8x8xf32>
    %c0_50 = arith.constant 0 : index
    %c0_51 = arith.constant 0 : index
    %48 = vector.load %arg4[%c0_50, %c0_51] : memref<24x8xf32, #tpu.memory_space<vmem>>, vector<24x8xf32>
    %cst_52 = arith.constant dense<0.000000e+00> : vector<24x8xf32>
    %49 = tpu.matmul %48, %47, %cst_52 {dimension_numbers = #tpu.dot_dimension_numbers<[1], [0], [0], [1], [0, 0, 1, 1], [], []>} : vector<24x8xf32>, vector<8x8xf32>, vector<24x8xf32> -> vector<24x8xf32>
    %c0_53 = arith.constant 0 : index
    %c0_54 = arith.constant 0 : index
    %50 = vector.load %arg14[%c0_53, %c0_54] : memref<8x128xf32, #tpu.memory_space<vmem>>, vector<8x128xf32>
    %cst_55 = arith.constant dense<0.000000e+00> : vector<8x128xf32>
    %51 = tpu.matmul %47, %50, %cst_55 {dimension_numbers = #tpu.dot_dimension_numbers<[1], [0], [0], [1], [0, 0, 1, 1], [], []>} : vector<8x8xf32>, vector<8x128xf32>, vector<8x128xf32> -> vector<8x128xf32>
    %52 = vector.extract_strided_slice %49 {offsets = [0, 0], sizes = [8, 8], strides = [1, 1]} : vector<24x8xf32> to vector<8x8xf32>
    %c0_56 = arith.constant 0 : index
    %c0_57 = arith.constant 0 : index
    %c0_58 = arith.constant 0 : index
    %53 = vector.load %arg13[%c0_56, %c0_57, %c0_58] : memref<3x8x128xf32, #tpu.memory_space<vmem>>, vector<1x8x128xf32>
    %54 = vector.shape_cast %53 : vector<1x8x128xf32> to vector<8x128xf32>
    %cst_59 = arith.constant dense<0.000000e+00> : vector<8x128xf32>
    %55 = tpu.matmul %52, %54, %cst_59 {dimension_numbers = #tpu.dot_dimension_numbers<[1], [0], [0], [1], [0, 0, 1, 1], [], []>} : vector<8x8xf32>, vector<8x128xf32>, vector<8x128xf32> -> vector<8x128xf32>
    %56 = arith.addf %51, %55 : vector<8x128xf32>
    %57 = vector.extract_strided_slice %49 {offsets = [8, 0], sizes = [8, 8], strides = [1, 1]} : vector<24x8xf32> to vector<8x8xf32>
    %c1_60 = arith.constant 1 : index
    %c0_61 = arith.constant 0 : index
    %c0_62 = arith.constant 0 : index
    %58 = vector.load %arg13[%c1_60, %c0_61, %c0_62] : memref<3x8x128xf32, #tpu.memory_space<vmem>>, vector<1x8x128xf32>
    %59 = vector.shape_cast %58 : vector<1x8x128xf32> to vector<8x128xf32>
    %cst_63 = arith.constant dense<0.000000e+00> : vector<8x128xf32>
    %60 = tpu.matmul %57, %59, %cst_63 {dimension_numbers = #tpu.dot_dimension_numbers<[1], [0], [0], [1], [0, 0, 1, 1], [], []>} : vector<8x8xf32>, vector<8x128xf32>, vector<8x128xf32> -> vector<8x128xf32>
    %61 = arith.addf %56, %60 : vector<8x128xf32>
    %62 = vector.extract_strided_slice %49 {offsets = [16, 0], sizes = [8, 8], strides = [1, 1]} : vector<24x8xf32> to vector<8x8xf32>
    %c2_64 = arith.constant 2 : index
    %c0_65 = arith.constant 0 : index
    %c0_66 = arith.constant 0 : index
    %63 = vector.load %arg13[%c2_64, %c0_65, %c0_66] : memref<3x8x128xf32, #tpu.memory_space<vmem>>, vector<1x8x128xf32>
    %64 = vector.shape_cast %63 : vector<1x8x128xf32> to vector<8x128xf32>
    %cst_67 = arith.constant dense<0.000000e+00> : vector<8x128xf32>
    %65 = tpu.matmul %62, %64, %cst_67 {dimension_numbers = #tpu.dot_dimension_numbers<[1], [0], [0], [1], [0, 0, 1, 1], [], []>} : vector<8x8xf32>, vector<8x128xf32>, vector<8x128xf32> -> vector<8x128xf32>
    %66 = arith.addf %61, %65 : vector<8x128xf32>
    %c0_68 = arith.constant 0 : index
    %c0_69 = arith.constant 0 : index
    %67 = vector.load %arg15[%c0_68, %c0_69] : memref<8x128xf32, #tpu.memory_space<vmem>>, vector<8x128xf32>
    tpu.vector_store %arg15[%c0_68, %c0_69], %66 {strides = array<i32>} : memref<8x128xf32, #tpu.memory_space<vmem>>, vector<8x128xf32>,
    return
  }
}

</mosaic_0001>

<llo_original>
// kernel: fm_encoder_forward.1
$region0: #{fm_encoder_forward.1}
  #allocation0 [shape = 'u32[]', space=smem, size = 0x4, offset = 0x4, fixed_abs, tag = 'smem constant byte address 0x4 - core index']
  #allocation1 [shape = 'u32[144,128]{1,0:T(1,128)}', space=vmem, size = 0x12000, scoped, tag = 'internal scratch']
  #allocation2 [shape = 'f32[8,32]{1,0:T(8,128)}', space=vmem, size = 0x1000, scoped, tag = 'scratch operand']
  %s0 = inlined_call_operand.vmem [shape: f32[16,12], index: 0, kind: input, shape index: {}]
  %s1 = inlined_call_operand.vmem [shape: f32[8,10], index: 1, kind: input, shape index: {}]
  %s2 = inlined_call_operand.vmem [shape: f32[16,16], index: 2, kind: input, shape index: {}]
  %s3 = inlined_call_operand.vmem [shape: f32[8,16], index: 3, kind: input, shape index: {}]
  %s4 = inlined_call_operand.vmem [shape: f32[24,8], index: 4, kind: input, shape index: {}]
  %s5 = inlined_call_operand.vmem [shape: f32[12,32], index: 5, kind: input, shape index: {}]
  %s6 = inlined_call_operand.vmem [shape: f32[1,32], index: 6, kind: input, shape index: {}]
  %s7 = inlined_call_operand.vmem [shape: f32[32,16], index: 7, kind: input, shape index: {}]
  %s8 = inlined_call_operand.vmem [shape: f32[1,16], index: 8, kind: input, shape index: {}]
  %s9 = inlined_call_operand.vmem [shape: f32[16,16], index: 9, kind: input, shape index: {}]
  %s10 = inlined_call_operand.vmem [shape: f32[10,16], index: 10, kind: input, shape index: {}]
  %s11 = inlined_call_operand.vmem [shape: f32[3,32,8], index: 11, kind: input, shape index: {}]
  %s12 = inlined_call_operand.vmem [shape: f32[32,8], index: 12, kind: input, shape index: {}]
  %s13 = inlined_call_operand.vmem [shape: f32[3,8,128], index: 13, kind: input, shape index: {}]
  %s14 = inlined_call_operand.vmem [shape: f32[8,128], index: 14, kind: input, shape index: {}]
  %s15 = inlined_call_operand.vmem [shape: f32[8,128], index: 15, kind: output, shape index: {}]
  %s16 = sld [smem:[#allocation0]]
  $region70: #{fm_encoder_forward.1} parent=0
    _
  %s18 = ssub.s32 1, %s16
  %s19 = scalar_select 0, %s18, %s16
  // Predicated region
  $region2: #{fm_encoder_forward.1} parent=0 // pred_check
    _
  $region3: #{fm_encoder_forward.1} parent=0 // pred_check_branch
    %21 = sbr.rel (0) target = $region5
  $region4: #{fm_encoder_forward.1} parent=0 // pred_region
    _
  $region5: #{fm_encoder_forward.1} parent=0 // pred_fallthru
    _
  // Predicated region
  $region6: #{fm_encoder_forward.1} parent=0 // pred_check
    _
  $region7: #{fm_encoder_forward.1} parent=0 // pred_check_branch
    %23 = sbr.rel (0) target = $region9
  $region8: #{fm_encoder_forward.1} parent=0 // pred_region
    _
  $region9: #{fm_encoder_forward.1} parent=0 // pred_fallthru
    _
  // Predicated region
  $region10: #{fm_encoder_forward.1} parent=0 // pred_check
    _
  $region11: #{fm_encoder_forward.1} parent=0 // pred_check_branch
    %25 = sbr.rel (0) target = $region13
  $region12: #{fm_encoder_forward.1} parent=0 // pred_region
    _
  $region13: #{fm_encoder_forward.1} parent=0 // pred_fallthru
    _
  // Predicated region
  $region14: #{fm_encoder_forward.1} parent=0 // pred_check
    _
  $region15: #{fm_encoder_forward.1} parent=0 // pred_check_branch
    %27 = sbr.rel (0) target = $region17
  $region16: #{fm_encoder_forward.1} parent=0 // pred_region
    _
  $region17: #{fm_encoder_forward.1} parent=0 // pred_fallthru
    _
  // Predicated region
  $region18: #{fm_encoder_forward.1} parent=0 // pred_check
    _
  $region19: #{fm_encoder_forward.1} parent=0 // pred_check_branch
    %29 = sbr.rel (0) target = $region21
  $region20: #{fm_encoder_forward.1} parent=0 // pred_region
    _
  $region21: #{fm_encoder_forward.1} parent=0 // pred_fallthru
    _
  // Predicated region
  $region22: #{fm_encoder_forward.1} parent=0 // pred_check
    _
  $region23: #{fm_encoder_forward.1} parent=0 // pred_check_branch
    %31 = sbr.rel (0) target = $region25
  $region24: #{fm_encoder_forward.1} parent=0 // pred_region
    _
  $region25: #{fm_encoder_forward.1} parent=0 // pred_fallthru
    _
  // Predicated region
  $region26: #{fm_encoder_forward.1} parent=0 // pred_check
    _
  $region27: #{fm_encoder_forward.1} parent=0 // pred_check_branch
    %33 = sbr.rel (0) target = $region29
  $region28: #{fm_encoder_forward.1} parent=0 // pred_region
    _
  $region29: #{fm_encoder_forward.1} parent=0 // pred_fallthru
    _
  // Predicated region
  $region30: #{fm_encoder_forward.1} parent=0 // pred_check
    _
  $region31: #{fm_encoder_forward.1} parent=0 // pred_check_branch
    %35 = sbr.rel (0) target = $region33
  $region32: #{fm_encoder_forward.1} parent=0 // pred_region
    _
  $region33: #{fm_encoder_forward.1} parent=0 // pred_fallthru
    _
  // Predicated region
  $region34: #{fm_encoder_forward.1} parent=0 // pred_check
    _
  $region35: #{fm_encoder_forward.1} parent=0 // pred_check_branch
    %37 = sbr.rel (0) target = $region37
  $region36: #{fm_encoder_forward.1} parent=0 // pred_region
    _
  $region37: #{fm_encoder_forward.1} parent=0 // pred_fallthru
    _
  // Predicated region
  $region38: #{fm_encoder_forward.1} parent=0 // pred_check
    _
  $region39: #{fm_encoder_forward.1} parent=0 // pred_check_branch
    %39 = sbr.rel (0) target = $region41
  $region40: #{fm_encoder_forward.1} parent=0 // pred_region
    _
  $region41: #{fm_encoder_forward.1} parent=0 // pred_fallthru
    _
  // Predicated region
  $region42: #{fm_encoder_forward.1} parent=0 // pred_check
    _
  $region43: #{fm_encoder_forward.1} parent=0 // pred_check_branch
    %41 = sbr.rel (0) target = $region45
  $region44: #{fm_encoder_forward.1} parent=0 // pred_region
    _
  $region45: #{fm_encoder_forward.1} parent=0 // pred_fallthru
    _
  // Predicated region
  $region46: #{fm_encoder_forward.1} parent=0 // pred_check
    _
  $region47: #{fm_encoder_forward.1} parent=0 // pred_check_branch
    %43 = sbr.rel (0) target = $region49
  $region48: #{fm_encoder_forward.1} parent=0 // pred_region
    _
  $region49: #{fm_encoder_forward.1} parent=0 // pred_fallthru
    _
  // Predicated region
  $region50: #{fm_encoder_forward.1} parent=0 // pred_check
    _
  $region51: #{fm_encoder_forward.1} parent=0 // pred_check_branch
    %45 = sbr.rel (0) target = $region53
  $region52: #{fm_encoder_forward.1} parent=0 // pred_region
    _
  $region53: #{fm_encoder_forward.1} parent=0 // pred_fallthru
    _
  // Predicated region
  $region54: #{fm_encoder_forward.1} parent=0 // pred_check
    _
  $region55: #{fm_encoder_forward.1} parent=0 // pred_check_branch
    %47 = sbr.rel (0) target = $region57
  $region56: #{fm_encoder_forward.1} parent=0 // pred_region
    _
  $region57: #{fm_encoder_forward.1} parent=0 // pred_fallthru
    _
  // Predicated region
  $region58: #{fm_encoder_forward.1} parent=0 // pred_check
    _
  $region59: #{fm_encoder_forward.1} parent=0 // pred_check_branch
    %49 = sbr.rel (0) target = $region61
  $region60: #{fm_encoder_forward.1} parent=0 // pred_region
    _
  $region61: #{fm_encoder_forward.1} parent=0 // pred_fallthru
    _
  %v50 = vld [vmem:[%s0] sm:$0xff]
  %v51 = vld [vmem:[%s0 + $0x8] sm:$0xff]
  %v52 = vld [vmem:[%s5] sm:$0xff]
  %v53 = vld [vmem:[%s5 + $0x8] sm:$0xf]
  %vm54 = vcmask 97280
  %v56 = vsel %vm54, %v50, 0
  %v59 = vsel %vm54, %v51, 0
  %vm61 = vcmask 1043456
  %v63 = vsel %vm61, %v53, 0
  %65 = vmatprep.subr.mxu0 0.0
  %66 = vmatpush1.msra.mxu0 %v52
  %67 = vmatprep.subr.mxu0 0.0
  %68 = vmatpush1.msra.mxu0 %v63
  %69 = vmatprep.subr.mxu0 0.0
  %70 = vmatpush1.msra.mxu0 0.0
  %71 = vmatprep.subr.mxu0 0.0
  %72 = vmatpush1.msra.mxu0 0.0
  %73 = vmatprep.subr.mxu0 0.0
  %74 = vmatpush1.msra.mxu0 0.0
  %75 = vmatprep.subr.mxu0 0.0
  %76 = vmatpush1.msra.mxu0 0.0
  %77 = vmatprep.subr.mxu0 0.0
  %78 = vmatpush1.msra.mxu0 0.0
  %79 = vmatprep.subr.mxu0 0.0
  %80 = vmatpush1.msra.mxu0 0.0
  %81 = vmatprep.subr.mxu0 0.0
  %82 = vmatpush1.msra.mxu0 0.0
  %83 = vmatprep.subr.mxu0 0.0
  %84 = vmatpush1.msra.mxu0 0.0
  %85 = vmatprep.subr.mxu0 0.0
  %86 = vmatpush1.msra.mxu0 0.0
  %87 = vmatprep.subr.mxu0 0.0
  %88 = vmatpush1.msra.mxu0 0.0
  %89 = vmatprep.subr.mxu0 0.0
  %90 = vmatpush1.msra.mxu0 0.0
  %91 = vmatprep.subr.mxu0 0.0
  %92 = vmatpush1.msra.mxu0 0.0
  %93 = vmatprep.subr.mxu0 0.0
  %94 = vmatpush1.msra.mxu0 0.0
  %95 = vmatprep.subr.mxu0 0.0
  %96 = vmatpush1.msra.mxu0 0.0
  %97 = vmatprep.subr.mxu0 0.0
  %98 = vmatpush1.msra.mxu0 0.0
  %99 = vmatprep.subr.mxu0 0.0
  %100 = vmatpush1.msra.mxu0 0.0
  %101 = vmatprep.subr.mxu0 0.0
  %102 = vmatpush1.msra.mxu0 0.0
  %103 = vmatprep.subr.mxu0 0.0
  %104 = vmatpush1.msra.mxu0 0.0
  %105 = vmatprep.subr.mxu0 0.0
  %106 = vmatpush1.msra.mxu0 0.0
  %107 = vmatprep.subr.mxu0 0.0
  %108 = vmatpush1.msra.mxu0 0.0
  %109 = vmatprep.subr.mxu0 0.0
  %110 = vmatpush1.msra.mxu0 0.0
  %111 = vmatprep.subr.mxu0 0.0
  %112 = vmatpush1.msra.mxu0 0.0
  %113 = vmatprep.subr.mxu0 0.0
  %114 = vmatpush1.msra.mxu0 0.0
  %115 = vmatprep.subr.mxu0 0.0
  %116 = vmatpush1.msra.mxu0 0.0
  %117 = vmatprep.subr.mxu0 0.0
  %118 = vmatpush1.msra.mxu0 0.0
  %119 = vmatprep.subr.mxu0 0.0
  %120 = vmatpush1.msra.mxu0 0.0
  %121 = vmatprep.subr.mxu0 0.0
  %122 = vmatpush1.msra.mxu0 0.0
  %123 = vmatprep.subr.mxu0 0.0
  %124 = vmatpush1.msra.mxu0 0.0
  %125 = vmatprep.subr.mxu0 0.0
  %126 = vmatpush1.msra.mxu0 0.0
  %127 = vmatprep.subr.mxu0 0.0
  %128 = vmatpush1.msra.mxu0 0.0
  %129 = vmatprep.mubr.f32.mxu0 0.0
  %130 = vmatmul.mubr.f32.gmra.mrb[0].mxu0 %v56
  %v131 = vpop.f32.mrb[0].mxu0
  %v132 = vadd.f32 0.0, %v131
  %v133 = vpop.f32.mrb[0].mxu0
  %134 = vmatprep.mubr.f32.mxu0 0.0
  %135 = vmatmul.mubr.f32.gmra.mrb[0].mxu0 %v59
  %v136 = vpop.f32.mrb[0].mxu0
  %v137 = vadd.f32 0.0, %v136
  %v138 = vpop.f32.mrb[0].mxu0
  %139 = vdwg.mxu0
  %v140 = vld [vmem:[%s2] sm:$0xff]
  %v141 = vld [vmem:[%s2 + $0x8] sm:$0xff]
  %v142 = vld [vmem:[%s6] sm:$0x1]
  %v144 = vlaneseq
  %v145 = vshrl.u32 %v144, 7
  %v146 = vsub.s32 0, %v145
  %v147 = vrot.slane %v142, %v146
  %vm149 = vcmask 130048
  %v151 = vsel %vm149, %v140, 0
  %v154 = vsel %vm149, %v141, 0
  %156 = vmatprep.subr.mxu0 0.0
  %157 = vmatpush1.msra.mxu0 %v132
  %158 = vmatprep.subr.mxu0 0.0
  %159 = vmatpush1.msra.mxu0 %v137
  %160 = vmatprep.subr.mxu0 0.0
  %161 = vmatpush1.msra.mxu0 0.0
  %162 = vmatprep.subr.mxu0 0.0
  %163 = vmatpush1.msra.mxu0 0.0
  %164 = vmatprep.subr.mxu0 0.0
  %165 = vmatpush1.msra.mxu0 0.0
  %166 = vmatprep.subr.mxu0 0.0
  %167 = vmatpush1.msra.mxu0 0.0
  %168 = vmatprep.subr.mxu0 0.0
  %169 = vmatpush1.msra.mxu0 0.0
  %170 = vmatprep.subr.mxu0 0.0
  %171 = vmatpush1.msra.mxu0 0.0
  %172 = vmatprep.subr.mxu0 0.0
  %173 = vmatpush1.msra.mxu0 0.0
  %174 = vmatprep.subr.mxu0 0.0
  %175 = vmatpush1.msra.mxu0 0.0
  %176 = vmatprep.subr.mxu0 0.0
  %177 = vmatpush1.msra.mxu0 0.0
  %178 = vmatprep.subr.mxu0 0.0
  %179 = vmatpush1.msra.mxu0 0.0
  %180 = vmatprep.subr.mxu0 0.0
  %181 = vmatpush1.msra.mxu0 0.0
  %182 = vmatprep.subr.mxu0 0.0
  %183 = vmatpush1.msra.mxu0 0.0
  %184 = vmatprep.subr.mxu0 0.0
  %185 = vmatpush1.msra.mxu0 0.0
  %186 = vmatprep.subr.mxu0 0.0
  %187 = vmatpush1.msra.mxu0 0.0
  %188 = vmatprep.subr.mxu0 0.0
  %189 = vmatpush1.msra.mxu0 0.0
  %190 = vmatprep.subr.mxu0 0.0
  %191 = vmatpush1.msra.mxu0 0.0
  %192 = vmatprep.subr.mxu0 0.0
  %193 = vmatpush1.msra.mxu0 0.0
  %194 = vmatprep.subr.mxu0 0.0
  %195 = vmatpush1.msra.mxu0 0.0
  %196 = vmatprep.subr.mxu0 0.0
  %197 = vmatpush1.msra.mxu0 0.0
  %198 = vmatprep.subr.mxu0 0.0
  %199 = vmatpush1.msra.mxu0 0.0
  %200 = vmatprep.subr.mxu0 0.0
  %201 = vmatpush1.msra.mxu0 0.0
  %202 = vmatprep.subr.mxu0 0.0
  %203 = vmatpush1.msra.mxu0 0.0
  %204 = vmatprep.subr.mxu0 0.0
  %205 = vmatpush1.msra.mxu0 0.0
  %206 = vmatprep.subr.mxu0 0.0
  %207 = vmatpush1.msra.mxu0 0.0
  %208 = vmatprep.subr.mxu0 0.0
  %209 = vmatpush1.msra.mxu0 0.0
  %210 = vmatprep.subr.mxu0 0.0
  %211 = vmatpush1.msra.mxu0 0.0
  %212 = vmatprep.subr.mxu0 0.0
  %213 = vmatpush1.msra.mxu0 0.0
  %214 = vmatprep.subr.mxu0 0.0
  %215 = vmatpush1.msra.mxu0 0.0
  %216 = vmatprep.subr.mxu0 0.0
  %217 = vmatpush1.msra.mxu0 0.0
  %218 = vmatprep.subr.mxu0 0.0
  %219 = vmatpush1.msra.mxu0 0.0
  %220 = vmatprep.mubr.f32.mxu0 0.0
  %221 = vmatmul.mubr.f32.gmra.mrb[0].mxu0 %v151
  %v222 = vpop.f32.mrb[0].mxu0
  %v223 = vadd.f32 %v147, %v222
  %v224 = vpop.f32.mrb[0].mxu0
  %225 = vmatprep.mubr.f32.mxu0 0.0
  %226 = vmatmul.mubr.f32.gmra.mrb[0].mxu0 %v154
  %v227 = vpop.f32.mrb[0].mxu0
  %v228 = vadd.f32 %v147, %v227
  %v229 = vpop.f32.mrb[0].mxu0
  %230 = vdwg.mxu0
  %v231 = vmax.f32 %v223, 0.0
  %v232 = vmax.f32 %v228, 0.0
  %v233 = vld [vmem:[%s7] sm:$0xff]
  %v234 = vld [vmem:[%s7 + $0x8] sm:$0xff]
  %v235 = vld [vmem:[%s7 + $0x10] sm:$0xff]
  %v236 = vld [vmem:[%s7 + $0x18] sm:$0xff]
  %vm237 = vcmask 261120
  %v239 = vsel %vm237, %v231, 0
  %v242 = vsel %vm237, %v232, 0
  %244 = vmatprep.subr.mxu0 0.0
  %245 = vmatpush1.msra.mxu0 %v233
  %246 = vmatprep.subr.mxu0 0.0
  %247 = vmatpush1.msra.mxu0 %v234
  %248 = vmatprep.subr.mxu0 0.0
  %249 = vmatpush1.msra.mxu0 %v235
  %250 = vmatprep.subr.mxu0 0.0
  %251 = vmatpush1.msra.mxu0 %v236
  %252 = vmatprep.subr.mxu0 0.0
  %253 = vmatpush1.msra.mxu0 0.0
  %254 = vmatprep.subr.mxu0 0.0
  %255 = vmatpush1.msra.mxu0 0.0
  %256 = vmatprep.subr.mxu0 0.0
  %257 = vmatpush1.msra.mxu0 0.0
  %258 = vmatprep.subr.mxu0 0.0
  %259 = vmatpush1.msra.mxu0 0.0
  %260 = vmatprep.subr.mxu0 0.0
  %261 = vmatpush1.msra.mxu0 0.0
  %262 = vmatprep.subr.mxu0 0.0
  %263 = vmatpush1.msra.mxu0 0.0
  %264 = vmatprep.subr.mxu0 0.0
  %265 = vmatpush1.msra.mxu0 0.0
  %266 = vmatprep.subr.mxu0 0.0
  %267 = vmatpush1.msra.mxu0 0.0
  %268 = vmatprep.subr.mxu0 0.0
  %269 = vmatpush1.msra.mxu0 0.0
  %270 = vmatprep.subr.mxu0 0.0
  %271 = vmatpush1.msra.mxu0 0.0
  %272 = vmatprep.subr.mxu0 0.0
  %273 = vmatpush1.msra.mxu0 0.0
  %274 = vmatprep.subr.mxu0 0.0
  %275 = vmatpush1.msra.mxu0 0.0
  %276 = vmatprep.subr.mxu0 0.0
  %277 = vmatpush1.msra.mxu0 0.0
  %278 = vmatprep.subr.mxu0 0.0
  %279 = vmatpush1.msra.mxu0 0.0
  %280 = vmatprep.subr.mxu0 0.0
  %281 = vmatpush1.msra.mxu0 0.0
  %282 = vmatprep.subr.mxu0 0.0
  %283 = vmatpush1.msra.mxu0 0.0
  %284 = vmatprep.subr.mxu0 0.0
  %285 = vmatpush1.msra.mxu0 0.0
  %286 = vmatprep.subr.mxu0 0.0
  %287 = vmatpush1.msra.mxu0 0.0
  %288 = vmatprep.subr.mxu0 0.0
  %289 = vmatpush1.msra.mxu0 0.0
  %290 = vmatprep.subr.mxu0 0.0
  %291 = vmatpush1.msra.mxu0 0.0
  %292 = vmatprep.subr.mxu0 0.0
  %293 = vmatpush1.msra.mxu0 0.0
  %294 = vmatprep.subr.mxu0 0.0
  %295 = vmatpush1.msra.mxu0 0.0
  %296 = vmatprep.subr.mxu0 0.0
  %297 = vmatpush1.msra.mxu0 0.0
  %298 = vmatprep.subr.mxu0 0.0
  %299 = vmatpush1.msra.mxu0 0.0
  %300 = vmatprep.subr.mxu0 0.0
  %301 = vmatpush1.msra.mxu0 0.0
  %302 = vmatprep.subr.mxu0 0.0
  %303 = vmatpush1.msra.mxu0 0.0
  %304 = vmatprep.subr.mxu0 0.0
  %305 = vmatpush1.msra.mxu0 0.0
  %306 = vmatprep.subr.mxu0 0.0
  %307 = vmatpush1.msra.mxu0 0.0
  %308 = vmatprep.mubr.f32.mxu0 0.0
  %309 = vmatmul.mubr.f32.gmra.mrb[0].mxu0 %v239
  %v310 = vpop.f32.mrb[0].mxu0
  %v311 = vadd.f32 0.0, %v310
  %v312 = vpop.f32.mrb[0].mxu0
  %313 = vmatprep.mubr.f32.mxu0 0.0
  %314 = vmatmul.mubr.f32.gmra.mrb[0].mxu0 %v242
  %v315 = vpop.f32.mrb[0].mxu0
  %v316 = vadd.f32 0.0, %v315
  %v317 = vpop.f32.mrb[0].mxu0
  %318 = vdwg.mxu0
  %v319 = vld [vmem:[%s8] sm:$0x1]
  %v321 = vlaneseq
  %v322 = vshrl.u32 %v321, 7
  %v323 = vsub.s32 0, %v322
  %v324 = vrot.slane %v319, %v323
  %326 = vmatprep.subr.mxu0 0.0
  %327 = vmatpush1.msra.mxu0 %v311
  %328 = vmatprep.subr.mxu0 0.0
  %329 = vmatpush1.msra.mxu0 %v316
  %330 = vmatprep.subr.mxu0 0.0
  %331 = vmatpush1.msra.mxu0 0.0
  %332 = vmatprep.subr.mxu0 0.0
  %333 = vmatpush1.msra.mxu0 0.0
  %334 = vmatprep.subr.mxu0 0.0
  %335 = vmatpush1.msra.mxu0 0.0
  %336 = vmatprep.subr.mxu0 0.0
  %337 = vmatpush1.msra.mxu0 0.0
  %338 = vmatprep.subr.mxu0 0.0
  %339 = vmatpush1.msra.mxu0 0.0
  %340 = vmatprep.subr.mxu0 0.0
  %341 = vmatpush1.msra.mxu0 0.0
  %342 = vmatprep.subr.mxu0 0.0
  %343 = vmatpush1.msra.mxu0 0.0
  %344 = vmatprep.subr.mxu0 0.0
  %345 = vmatpush1.msra.mxu0 0.0
  %346 = vmatprep.subr.mxu0 0.0
  %347 = vmatpush1.msra.mxu0 0.0
  %348 = vmatprep.subr.mxu0 0.0
  %349 = vmatpush1.msra.mxu0 0.0
  %350 = vmatprep.subr.mxu0 0.0
  %351 = vmatpush1.msra.mxu0 0.0
  %352 = vmatprep.subr.mxu0 0.0
  %353 = vmatpush1.msra.mxu0 0.0
  %354 = vmatprep.subr.mxu0 0.0
  %355 = vmatpush1.msra.mxu0 0.0
  %356 = vmatprep.subr.mxu0 0.0
  %357 = vmatpush1.msra.mxu0 0.0
  %358 = vmatprep.subr.mxu0 0.0
  %359 = vmatpush1.msra.mxu0 0.0
  %360 = vmatprep.subr.mxu0 0.0
  %361 = vmatpush1.msra.mxu0 0.0
  %362 = vmatprep.subr.mxu0 0.0
  %363 = vmatpush1.msra.mxu0 0.0
  %364 = vmatprep.subr.mxu0 0.0
  %365 = vmatpush1.msra.mxu0 0.0
  %366 = vmatprep.subr.mxu0 0.0
  %367 = vmatpush1.msra.mxu0 0.0
  %368 = vmatprep.subr.mxu0 0.0
  %369 = vmatpush1.msra.mxu0 0.0
  %370 = vmatprep.subr.mxu0 0.0
  %371 = vmatpush1.msra.mxu0 0.0
  %372 = vmatprep.subr.mxu0 0.0
  %373 = vmatpush1.msra.mxu0 0.0
  %374 = vmatprep.subr.mxu0 0.0
  %375 = vmatpush1.msra.mxu0 0.0
  %376 = vmatprep.subr.mxu0 0.0
  %377 = vmatpush1.msra.mxu0 0.0
  %378 = vmatprep.subr.mxu0 0.0
  %379 = vmatpush1.msra.mxu0 0.0
  %380 = vmatprep.subr.mxu0 0.0
  %381 = vmatpush1.msra.mxu0 0.0
  %382 = vmatprep.subr.mxu0 0.0
  %383 = vmatpush1.msra.mxu0 0.0
  %384 = vmatprep.subr.mxu0 0.0
  %385 = vmatpush1.msra.mxu0 0.0
  %386 = vmatprep.subr.mxu0 0.0
  %387 = vmatpush1.msra.mxu0 0.0
  %388 = vmatprep.subr.mxu0 0.0
  %389 = vmatpush1.msra.mxu0 0.0
  %390 = vmatprep.mubr.f32.mxu0 0.0
  %391 = vmatmul.mubr.f32.gmra.mrb[0].mxu0 %v151
  %v392 = vpop.f32.mrb[0].mxu0
  %v393 = vadd.f32 %v324, %v392
  %v394 = vpop.f32.mrb[0].mxu0
  %395 = vmatprep.mubr.f32.mxu0 0.0
  %396 = vmatmul.mubr.f32.gmra.mrb[0].mxu0 %v154
  %v397 = vpop.f32.mrb[0].mxu0
  %v398 = vadd.f32 %v324, %v397
  %v399 = vpop.f32.mrb[0].mxu0
  %400 = vdwg.mxu0
  %v401 = vld [vmem:[%s3] sm:$0xff]
  %v403 = vsel %vm149, %v401, 0
  %405 = vmatprep.subr.mxu0 0.0
  %406 = vmatpush1.msra.mxu0 %v393
  %407 = vmatprep.subr.mxu0 0.0
  %408 = vmatpush1.msra.mxu0 %v398
  %409 = vmatprep.subr.mxu0 0.0
  %410 = vmatpush1.msra.mxu0 0.0
  %411 = vmatprep.subr.mxu0 0.0
  %412 = vmatpush1.msra.mxu0 0.0
  %413 = vmatprep.subr.mxu0 0.0
  %414 = vmatpush1.msra.mxu0 0.0
  %415 = vmatprep.subr.mxu0 0.0
  %416 = vmatpush1.msra.mxu0 0.0
  %417 = vmatprep.subr.mxu0 0.0
  %418 = vmatpush1.msra.mxu0 0.0
  %419 = vmatprep.subr.mxu0 0.0
  %420 = vmatpush1.msra.mxu0 0.0
  %421 = vmatprep.subr.mxu0 0.0
  %422 = vmatpush1.msra.mxu0 0.0
  %423 = vmatprep.subr.mxu0 0.0
  %424 = vmatpush1.msra.mxu0 0.0
  %425 = vmatprep.subr.mxu0 0.0
  %426 = vmatpush1.msra.mxu0 0.0
  %427 = vmatprep.subr.mxu0 0.0
  %428 = vmatpush1.msra.mxu0 0.0
  %429 = vmatprep.subr.mxu0 0.0
  %430 = vmatpush1.msra.mxu0 0.0
  %431 = vmatprep.subr.mxu0 0.0
  %432 = vmatpush1.msra.mxu0 0.0
  %433 = vmatprep.subr.mxu0 0.0
  %434 = vmatpush1.msra.mxu0 0.0
  %435 = vmatprep.subr.mxu0 0.0
  %436 = vmatpush1.msra.mxu0 0.0
  %437 = vmatprep.subr.mxu0 0.0
  %438 = vmatpush1.msra.mxu0 0.0
  %439 = vmatprep.subr.mxu0 0.0
  %440 = vmatpush1.msra.mxu0 0.0
  %441 = vmatprep.subr.mxu0 0.0
  %442 = vmatpush1.msra.mxu0 0.0
  %443 = vmatprep.subr.mxu0 0.0
  %444 = vmatpush1.msra.mxu0 0.0
  %445 = vmatprep.subr.mxu0 0.0
  %446 = vmatpush1.msra.mxu0 0.0
  %447 = vmatprep.subr.mxu0 0.0
  %448 = vmatpush1.msra.mxu0 0.0
  %449 = vmatprep.subr.mxu0 0.0
  %450 = vmatpush1.msra.mxu0 0.0
  %451 = vmatprep.subr.mxu0 0.0
  %452 = vmatpush1.msra.mxu0 0.0
  %453 = vmatprep.subr.mxu0 0.0
  %454 = vmatpush1.msra.mxu0 0.0
  %455 = vmatprep.subr.mxu0 0.0
  %456 = vmatpush1.msra.mxu0 0.0
  %457 = vmatprep.subr.mxu0 0.0
  %458 = vmatpush1.msra.mxu0 0.0
  %459 = vmatprep.subr.mxu0 0.0
  %460 = vmatpush1.msra.mxu0 0.0
  %461 = vmatprep.subr.mxu0 0.0
  %462 = vmatpush1.msra.mxu0 0.0
  %463 = vmatprep.subr.mxu0 0.0
  %464 = vmatpush1.msra.mxu0 0.0
  %465 = vmatprep.subr.mxu0 0.0
  %466 = vmatpush1.msra.mxu0 0.0
  %467 = vmatprep.subr.mxu0 0.0
  %468 = vmatpush1.msra.mxu0 0.0
  %469 = vmatprep.mubr.f32.mxu0 0.0
  %470 = vmatmul.mubr.f32.gmra.mrb[0].mxu0 %v403
  %v471 = vpop.f32.mrb[0].mxu0
  %v472 = vadd.f32 0.0, %v471
  %v473 = vpop.f32.mrb[0].mxu0
  %474 = vdwg.mxu0
  %v475 = vld [vmem:[%s9] sm:$0xff]
  %v476 = vld [vmem:[%s9 + $0x8] sm:$0xff]
  %v478 = vsel %vm149, %v472, 0
  %480 = vmatprep.subr.mxu0 0.0
  %481 = vmatpush1.msra.mxu0 %v475
  %482 = vmatprep.subr.mxu0 0.0
  %483 = vmatpush1.msra.mxu0 %v476
  %484 = vmatprep.subr.mxu0 0.0
  %485 = vmatpush1.msra.mxu0 0.0
  %486 = vmatprep.subr.mxu0 0.0
  %487 = vmatpush1.msra.mxu0 0.0
  %488 = vmatprep.subr.mxu0 0.0
  %489 = vmatpush1.msra.mxu0 0.0
  %490 = vmatprep.subr.mxu0 0.0
  %491 = vmatpush1.msra.mxu0 0.0
  %492 = vmatprep.subr.mxu0 0.0
  %493 = vmatpush1.msra.mxu0 0.0
  %494 = vmatprep.subr.mxu0 0.0
  %495 = vmatpush1.msra.mxu0 0.0
  %496 = vmatprep.subr.mxu0 0.0
  %497 = vmatpush1.msra.mxu0 0.0
  %498 = vmatprep.subr.mxu0 0.0
  %499 = vmatpush1.msra.mxu0 0.0
  %500 = vmatprep.subr.mxu0 0.0
  %501 = vmatpush1.msra.mxu0 0.0
  %502 = vmatprep.subr.mxu0 0.0
  %503 = vmatpush1.msra.mxu0 0.0
  %504 = vmatprep.subr.mxu0 0.0
  %505 = vmatpush1.msra.mxu0 0.0
  %506 = vmatprep.subr.mxu0 0.0
  %507 = vmatpush1.msra.mxu0 0.0
  %508 = vmatprep.subr.mxu0 0.0
  %509 = vmatpush1.msra.mxu0 0.0
  %510 = vmatprep.subr.mxu0 0.0
  %511 = vmatpush1.msra.mxu0 0.0
  %512 = vmatprep.subr.mxu0 0.0
  %513 = vmatpush1.msra.mxu0 0.0
  %514 = vmatprep.subr.mxu0 0.0
  %515 = vmatpush1.msra.mxu0 0.0
  %516 = vmatprep.subr.mxu0 0.0
  %517 = vmatpush1.msra.mxu0 0.0
  %518 = vmatprep.subr.mxu0 0.0
  %519 = vmatpush1.msra.mxu0 0.0
  %520 = vmatprep.subr.mxu0 0.0
  %521 = vmatpush1.msra.mxu0 0.0
  %522 = vmatprep.subr.mxu0 0.0
  %523 = vmatpush1.msra.mxu0 0.0
  %524 = vmatprep.subr.mxu0 0.0
  %525 = vmatpush1.msra.mxu0 0.0
  %526 = vmatprep.subr.mxu0 0.0
  %527 = vmatpush1.msra.mxu0 0.0
  %528 = vmatprep.subr.mxu0 0.0
  %529 = vmatpush1.msra.mxu0 0.0
  %530 = vmatprep.subr.mxu0 0.0
  %531 = vmatpush1.msra.mxu0 0.0
  %532 = vmatprep.subr.mxu0 0.0
  %533 = vmatpush1.msra.mxu0 0.0
  %534 = vmatprep.subr.mxu0 0.0
  %535 = vmatpush1.msra.mxu0 0.0
  %536 = vmatprep.subr.mxu0 0.0
  %537 = vmatpush1.msra.mxu0 0.0
  %538 = vmatprep.subr.mxu0 0.0
  %539 = vmatpush1.msra.mxu0 0.0
  %540 = vmatprep.subr.mxu0 0.0
  %541 = vmatpush1.msra.mxu0 0.0
  %542 = vmatprep.subr.mxu0 0.0
  %543 = vmatpush1.msra.mxu0 0.0
  %544 = vmatprep.mubr.f32.mxu0 0.0
  %545 = vmatmul.mubr.f32.gmra.mrb[0].mxu0 %v478
  %v546 = vpop.f32.mrb[0].mxu0
  %v547 = vadd.f32 0.0, %v546
  %v548 = vpop.f32.mrb[0].mxu0
  %549 = vdwg.mxu0
  %v550 = vld [vmem:[%s1] sm:$0xff]
  %v551 = vld [vmem:[%s10] sm:$0xff]
  %v552 = vld [vmem:[%s10 + $0x8] sm:$0x3]
  %vm553 = vcmask 80896
  %v555 = vsel %vm553, %v550, 0
  %vm557 = vcmask 1041408
  %v559 = vsel %vm557, %v552, 0
  %561 = vmatprep.subr.mxu0 0.0
  %562 = vmatpush1.msra.mxu0 %v551
  %563 = vmatprep.subr.mxu0 0.0
  %564 = vmatpush1.msra.mxu0 %v559
  %565 = vmatprep.subr.mxu0 0.0
  %566 = vmatpush1.msra.mxu0 0.0
  %567 = vmatprep.subr.mxu0 0.0
  %568 = vmatpush1.msra.mxu0 0.0
  %569 = vmatprep.subr.mxu0 0.0
  %570 = vmatpush1.msra.mxu0 0.0
  %571 = vmatprep.subr.mxu0 0.0
  %572 = vmatpush1.msra.mxu0 0.0
  %573 = vmatprep.subr.mxu0 0.0
  %574 = vmatpush1.msra.mxu0 0.0
  %575 = vmatprep.subr.mxu0 0.0
  %576 = vmatpush1.msra.mxu0 0.0
  %577 = vmatprep.subr.mxu0 0.0
  %578 = vmatpush1.msra.mxu0 0.0
  %579 = vmatprep.subr.mxu0 0.0
  %580 = vmatpush1.msra.mxu0 0.0
  %581 = vmatprep.subr.mxu0 0.0
  %582 = vmatpush1.msra.mxu0 0.0
  %583 = vmatprep.subr.mxu0 0.0
  %584 = vmatpush1.msra.mxu0 0.0
  %585 = vmatprep.subr.mxu0 0.0
  %586 = vmatpush1.msra.mxu0 0.0
  %587 = vmatprep.subr.mxu0 0.0
  %588 = vmatpush1.msra.mxu0 0.0
  %589 = vmatprep.subr.mxu0 0.0
  %590 = vmatpush1.msra.mxu0 0.0
  %591 = vmatprep.subr.mxu0 0.0
  %592 = vmatpush1.msra.mxu0 0.0
  %593 = vmatprep.subr.mxu0 0.0
  %594 = vmatpush1.msra.mxu0 0.0
  %595 = vmatprep.subr.mxu0 0.0
  %596 = vmatpush1.msra.mxu0 0.0
  %597 = vmatprep.subr.mxu0 0.0
  %598 = vmatpush1.msra.mxu0 0.0
  %599 = vmatprep.subr.mxu0 0.0
  %600 = vmatpush1.msra.mxu0 0.0
  %601 = vmatprep.subr.mxu0 0.0
  %602 = vmatpush1.msra.mxu0 0.0
  %603 = vmatprep.subr.mxu0 0.0
  %604 = vmatpush1.msra.mxu0 0.0
  %605 = vmatprep.subr.mxu0 0.0
  %606 = vmatpush1.msra.mxu0 0.0
  %607 = vmatprep.subr.mxu0 0.0
  %608 = vmatpush1.msra.mxu0 0.0
  %609 = vmatprep.subr.mxu0 0.0
  %610 = vmatpush1.msra.mxu0 0.0
  %611 = vmatprep.subr.mxu0 0.0
  %612 = vmatpush1.msra.mxu0 0.0
  %613 = vmatprep.subr.mxu0 0.0
  %614 = vmatpush1.msra.mxu0 0.0
  %615 = vmatprep.subr.mxu0 0.0
  %616 = vmatpush1.msra.mxu0 0.0
  %617 = vmatprep.subr.mxu0 0.0
  %618 = vmatpush1.msra.mxu0 0.0
  %619 = vmatprep.subr.mxu0 0.0
  %620 = vmatpush1.msra.mxu0 0.0
  %621 = vmatprep.subr.mxu0 0.0
  %622 = vmatpush1.msra.mxu0 0.0
  %623 = vmatprep.subr.mxu0 0.0
  %624 = vmatpush1.msra.mxu0 0.0
  %625 = vmatprep.mubr.f32.mxu0 0.0
  %626 = vmatmul.mubr.f32.gmra.mrb[0].mxu0 %v555
  %v627 = vpop.f32.mrb[0].mxu0
  %v628 = vadd.f32 0.0, %v627
  %v629 = vpop.f32.mrb[0].mxu0
  %630 = vdwg.mxu0
  %631 = vst.msk [vmem:[#allocation2] sm:$0xff] %vm149, %v628
  %633 = vrot.lane.b32.xlu0 %v547, 16
  %v634 = vpop.permute.xlu0 %633
  %vm636 = vcmask 261248
  %637 = vst.msk [vmem:[#allocation2] sm:$0xff] %vm636, %v634
  %v638 = vld [vmem:[#allocation2] sm:$0xff]
  %v639 = vld [vmem:[%s4] sm:$0xff]
  %v640 = vld [vmem:[%s4 + $0x8] sm:$0xff]
  %v641 = vld [vmem:[%s4 + $0x10] sm:$0xff]
  %vm642 = vcmask 64512
  %v644 = vsel %vm642, %v639, 0
  %v647 = vsel %vm642, %v640, 0
  %v650 = vsel %vm642, %v641, 0
  %652 = vmatprep.subr.mxu0 0.0
  %653 = vmatpush1.msra.mxu0 %v638
  %654 = vmatprep.subr.mxu0 0.0
  %655 = vmatpush1.msra.mxu0 0.0
  %656 = vmatprep.subr.mxu0 0.0
  %657 = vmatpush1.msra.mxu0 0.0
  %658 = vmatprep.subr.mxu0 0.0
  %659 = vmatpush1.msra.mxu0 0.0
  %660 = vmatprep.subr.mxu0 0.0
  %661 = vmatpush1.msra.mxu0 0.0
  %662 = vmatprep.subr.mxu0 0.0
  %663 = vmatpush1.msra.mxu0 0.0
  %664 = vmatprep.subr.mxu0 0.0
  %665 = vmatpush1.msra.mxu0 0.0
  %666 = vmatprep.subr.mxu0 0.0
  %667 = vmatpush1.msra.mxu0 0.0
  %668 = vmatprep.subr.mxu0 0.0
  %669 = vmatpush1.msra.mxu0 0.0
  %670 = vmatprep.subr.mxu0 0.0
  %671 = vmatpush1.msra.mxu0 0.0
  %672 = vmatprep.subr.mxu0 0.0
  %673 = vmatpush1.msra.mxu0 0.0
  %674 = vmatprep.subr.mxu0 0.0
  %675 = vmatpush1.msra.mxu0 0.0
  %676 = vmatprep.subr.mxu0 0.0
  %677 = vmatpush1.msra.mxu0 0.0
  %678 = vmatprep.subr.mxu0 0.0
  %679 = vmatpush1.msra.mxu0 0.0
  %680 = vmatprep.subr.mxu0 0.0
  %681 = vmatpush1.msra.mxu0 0.0
  %682 = vmatprep.subr.mxu0 0.0
  %683 = vmatpush1.msra.mxu0 0.0
  %684 = vmatprep.subr.mxu0 0.0
  %685 = vmatpush1.msra.mxu0 0.0
  %686 = vmatprep.subr.mxu0 0.0
  %687 = vmatpush1.msra.mxu0 0.0
  %688 = vmatprep.subr.mxu0 0.0
  %689 = vmatpush1.msra.mxu0 0.0
  %690 = vmatprep.subr.mxu0 0.0
  %691 = vmatpush1.msra.mxu0 0.0
  %692 = vmatprep.subr.mxu0 0.0
  %693 = vmatpush1.msra.mxu0 0.0
  %694 = vmatprep.subr.mxu0 0.0
  %695 = vmatpush1.msra.mxu0 0.0
  %696 = vmatprep.subr.mxu0 0.0
  %697 = vmatpush1.msra.mxu0 0.0
  %698 = vmatprep.subr.mxu0 0.0
  %699 = vmatpush1.msra.mxu0 0.0
  %700 = vmatprep.subr.mxu0 0.0
  %701 = vmatpush1.msra.mxu0 0.0
  %702 = vmatprep.subr.mxu0 0.0
  %703 = vmatpush1.msra.mxu0 0.0
  %704 = vmatprep.subr.mxu0 0.0
  %705 = vmatpush1.msra.mxu0 0.0
  %706 = vmatprep.subr.mxu0 0.0
  %707 = vmatpush1.msra.mxu0 0.0
  %708 = vmatprep.subr.mxu0 0.0
  %709 = vmatpush1.msra.mxu0 0.0
  %710 = vmatprep.subr.mxu0 0.0
  %711 = vmatpush1.msra.mxu0 0.0
  %712 = vmatprep.subr.mxu0 0.0
  %713 = vmatpush1.msra.mxu0 0.0
  %714 = vmatprep.subr.mxu0 0.0
  %715 = vmatpush1.msra.mxu0 0.0
  %716 = vmatprep.mubr.f32.mxu0 0.0
  %717 = vmatmul.mubr.f32.gmra.mrb[0].mxu0 %v644
  %v718 = vpop.f32.mrb[0].mxu0
  %v719 = vadd.f32 0.0, %v718
  %v720 = vpop.f32.mrb[0].mxu0
  %721 = vmatprep.mubr.f32.mxu0 0.0
  %722 = vmatmul.mubr.f32.gmra.mrb[0].mxu0 %v647
  %v723 = vpop.f32.mrb[0].mxu0
  %v724 = vadd.f32 0.0, %v723
  %v725 = vpop.f32.mrb[0].mxu0
  %726 = vmatprep.mubr.f32.mxu0 0.0
  %727 = vmatmul.mubr.f32.gmra.mrb[0].mxu0 %v650
  %v728 = vpop.f32.mrb[0].mxu0
  %v729 = vadd.f32 0.0, %v728
  %v730 = vpop.f32.mrb[0].mxu0
  %731 = vdwg.mxu0
  %v732 = vld [vmem:[%s12] sm:$0xff]
  %v733 = vld [vmem:[%s12 + $0x8] sm:$0xff]
  %v734 = vld [vmem:[%s12 + $0x10] sm:$0xff]
  %v735 = vld [vmem:[%s12 + $0x18] sm:$0xff]
  %v736 = vld [vmem:[%s11] sm:$0xff]
  %v737 = vld [vmem:[%s11 + $0x8] sm:$0xff]
  %v738 = vld [vmem:[%s11 + $0x10] sm:$0xff]
  %v739 = vld [vmem:[%s11 + $0x18] sm:$0xff]
  %v741 = vsel %vm237, %v719, 0
  %743 = vmatprep.subr.mxu0 0.0
  %744 = vmatpush1.msra.mxu0 %v736
  %745 = vmatprep.subr.mxu0 0.0
  %746 = vmatpush1.msra.mxu0 %v737
  %747 = vmatprep.subr.mxu0 0.0
  %748 = vmatpush1.msra.mxu0 %v738
  %749 = vmatprep.subr.mxu0 0.0
  %750 = vmatpush1.msra.mxu0 %v739
  %751 = vmatprep.subr.mxu0 0.0
  %752 = vmatpush1.msra.mxu0 0.0
  %753 = vmatprep.subr.mxu0 0.0
  %754 = vmatpush1.msra.mxu0 0.0
  %755 = vmatprep.subr.mxu0 0.0
  %756 = vmatpush1.msra.mxu0 0.0
  %757 = vmatprep.subr.mxu0 0.0
  %758 = vmatpush1.msra.mxu0 0.0
  %759 = vmatprep.subr.mxu0 0.0
  %760 = vmatpush1.msra.mxu0 0.0
  %761 = vmatprep.subr.mxu0 0.0
  %762 = vmatpush1.msra.mxu0 0.0
  %763 = vmatprep.subr.mxu0 0.0
  %764 = vmatpush1.msra.mxu0 0.0
  %765 = vmatprep.subr.mxu0 0.0
  %766 = vmatpush1.msra.mxu0 0.0
  %767 = vmatprep.subr.mxu0 0.0
  %768 = vmatpush1.msra.mxu0 0.0
  %769 = vmatprep.subr.mxu0 0.0
  %770 = vmatpush1.msra.mxu0 0.0
  %771 = vmatprep.subr.mxu0 0.0
  %772 = vmatpush1.msra.mxu0 0.0
  %773 = vmatprep.subr.mxu0 0.0
  %774 = vmatpush1.msra.mxu0 0.0
  %775 = vmatprep.subr.mxu0 0.0
  %776 = vmatpush1.msra.mxu0 0.0
  %777 = vmatprep.subr.mxu0 0.0
  %778 = vmatpush1.msra.mxu0 0.0
  %779 = vmatprep.subr.mxu0 0.0
  %780 = vmatpush1.msra.mxu0 0.0
  %781 = vmatprep.subr.mxu0 0.0
  %782 = vmatpush1.msra.mxu0 0.0
  %783 = vmatprep.subr.mxu0 0.0
  %784 = vmatpush1.msra.mxu0 0.0
  %785 = vmatprep.subr.mxu0 0.0
  %786 = vmatpush1.msra.mxu0 0.0
  %787 = vmatprep.subr.mxu0 0.0
  %788 = vmatpush1.msra.mxu0 0.0
  %789 = vmatprep.subr.mxu0 0.0
  %790 = vmatpush1.msra.mxu0 0.0
  %791 = vmatprep.subr.mxu0 0.0
  %792 = vmatpush1.msra.mxu0 0.0
  %793 = vmatprep.subr.mxu0 0.0
  %794 = vmatpush1.msra.mxu0 0.0
  %795 = vmatprep.subr.mxu0 0.0
  %796 = vmatpush1.msra.mxu0 0.0
  %797 = vmatprep.subr.mxu0 0.0
  %798 = vmatpush1.msra.mxu0 0.0
  %799 = vmatprep.subr.mxu0 0.0
  %800 = vmatpush1.msra.mxu0 0.0
  %801 = vmatprep.subr.mxu0 0.0
  %802 = vmatpush1.msra.mxu0 0.0
  %803 = vmatprep.subr.mxu0 0.0
  %804 = vmatpush1.msra.mxu0 0.0
  %805 = vmatprep.subr.mxu0 0.0
  %806 = vmatpush1.msra.mxu0 0.0
  %807 = vmatprep.mubr.f32.mxu0 0.0
  %808 = vmatmul.mubr.f32.gmra.mrb[0].mxu0 %v741
  %v809 = vpop.f32.mrb[0].mxu0
  %v810 = vadd.f32 0.0, %v809
  %v811 = vpop.f32.mrb[0].mxu0
  %812 = vdwg.mxu0
  %v814 = vsel %vm237, %v638, 0
  %816 = vmatprep.subr.mxu0 0.0
  %817 = vmatpush1.msra.mxu0 %v732
  %818 = vmatprep.subr.mxu0 0.0
  %819 = vmatpush1.msra.mxu0 %v733
  %820 = vmatprep.subr.mxu0 0.0
  %821 = vmatpush1.msra.mxu0 %v734
  %822 = vmatprep.subr.mxu0 0.0
  %823 = vmatpush1.msra.mxu0 %v735
  %824 = vmatprep.subr.mxu0 0.0
  %825 = vmatpush1.msra.mxu0 0.0
  %826 = vmatprep.subr.mxu0 0.0
  %827 = vmatpush1.msra.mxu0 0.0
  %828 = vmatprep.subr.mxu0 0.0
  %829 = vmatpush1.msra.mxu0 0.0
  %830 = vmatprep.subr.mxu0 0.0
  %831 = vmatpush1.msra.mxu0 0.0
  %832 = vmatprep.subr.mxu0 0.0
  %833 = vmatpush1.msra.mxu0 0.0
  %834 = vmatprep.subr.mxu0 0.0
  %835 = vmatpush1.msra.mxu0 0.0
  %836 = vmatprep.subr.mxu0 0.0
  %837 = vmatpush1.msra.mxu0 0.0
  %838 = vmatprep.subr.mxu0 0.0
  %839 = vmatpush1.msra.mxu0 0.0
  %840 = vmatprep.subr.mxu0 0.0
  %841 = vmatpush1.msra.mxu0 0.0
  %842 = vmatprep.subr.mxu0 0.0
  %843 = vmatpush1.msra.mxu0 0.0
  %844 = vmatprep.subr.mxu0 0.0
  %845 = vmatpush1.msra.mxu0 0.0
  %846 = vmatprep.subr.mxu0 0.0
  %847 = vmatpush1.msra.mxu0 0.0
  %848 = vmatprep.subr.mxu0 0.0
  %849 = vmatpush1.msra.mxu0 0.0
  %850 = vmatprep.subr.mxu0 0.0
  %851 = vmatpush1.msra.mxu0 0.0
  %852 = vmatprep.subr.mxu0 0.0
  %853 = vmatpush1.msra.mxu0 0.0
  %854 = vmatprep.subr.mxu0 0.0
  %855 = vmatpush1.msra.mxu0 0.0
  %856 = vmatprep.subr.mxu0 0.0
  %857 = vmatpush1.msra.mxu0 0.0
  %858 = vmatprep.subr.mxu0 0.0
  %859 = vmatpush1.msra.mxu0 0.0
  %860 = vmatprep.subr.mxu0 0.0
  %861 = vmatpush1.msra.mxu0 0.0
  %862 = vmatprep.subr.mxu0 0.0
  %863 = vmatpush1.msra.mxu0 0.0
  %864 = vmatprep.subr.mxu0 0.0
  %865 = vmatpush1.msra.mxu0 0.0
  %866 = vmatprep.subr.mxu0 0.0
  %867 = vmatpush1.msra.mxu0 0.0
  %868 = vmatprep.subr.mxu0 0.0
  %869 = vmatpush1.msra.mxu0 0.0
  %870 = vmatprep.subr.mxu0 0.0
  %871 = vmatpush1.msra.mxu0 0.0
  %872 = vmatprep.subr.mxu0 0.0
  %873 = vmatpush1.msra.mxu0 0.0
  %874 = vmatprep.subr.mxu0 0.0
  %875 = vmatpush1.msra.mxu0 0.0
  %876 = vmatprep.subr.mxu0 0.0
  %877 = vmatpush1.msra.mxu0 0.0
  %878 = vmatprep.subr.mxu0 0.0
  %879 = vmatpush1.msra.mxu0 0.0
  %880 = vmatprep.mubr.f32.mxu0 0.0
  %881 = vmatmul.mubr.f32.gmra.mrb[0].mxu0 %v814
  %v882 = vpop.f32.mrb[0].mxu0
  %v883 = vadd.f32 %v810, %v882
  %v884 = vpop.f32.mrb[0].mxu0
  %885 = vdwg.mxu0
  %s886 = scalar_lea.vmem %s11, 32
  %v887 = vld [vmem:[%s886] sm:$0xff]
  %v888 = vld [vmem:[%s886 + $0x8] sm:$0xff]
  %v889 = vld [vmem:[%s886 + $0x10] sm:$0xff]
  %v890 = vld [vmem:[%s886 + $0x18] sm:$0xff]
  %v892 = vsel %vm237, %v724, 0
  %894 = vmatprep.subr.mxu0 0.0
  %895 = vmatpush1.msra.mxu0 %v887
  %896 = vmatprep.subr.mxu0 0.0
  %897 = vmatpush1.msra.mxu0 %v888
  %898 = vmatprep.subr.mxu0 0.0
  %899 = vmatpush1.msra.mxu0 %v889
  %900 = vmatprep.subr.mxu0 0.0
  %901 = vmatpush1.msra.mxu0 %v890
  %902 = vmatprep.subr.mxu0 0.0
  %903 = vmatpush1.msra.mxu0 0.0
  %904 = vmatprep.subr.mxu0 0.0
  %905 = vmatpush1.msra.mxu0 0.0
  %906 = vmatprep.subr.mxu0 0.0
  %907 = vmatpush1.msra.mxu0 0.0
  %908 = vmatprep.subr.mxu0 0.0
  %909 = vmatpush1.msra.mxu0 0.0
  %910 = vmatprep.subr.mxu0 0.0
  %911 = vmatpush1.msra.mxu0 0.0
  %912 = vmatprep.subr.mxu0 0.0
  %913 = vmatpush1.msra.mxu0 0.0
  %914 = vmatprep.subr.mxu0 0.0
  %915 = vmatpush1.msra.mxu0 0.0
  %916 = vmatprep.subr.mxu0 0.0
  %917 = vmatpush1.msra.mxu0 0.0
  %918 = vmatprep.subr.mxu0 0.0
  %919 = vmatpush1.msra.mxu0 0.0
  %920 = vmatprep.subr.mxu0 0.0
  %921 = vmatpush1.msra.mxu0 0.0
  %922 = vmatprep.subr.mxu0 0.0
  %923 = vmatpush1.msra.mxu0 0.0
  %924 = vmatprep.subr.mxu0 0.0
  %925 = vmatpush1.msra.mxu0 0.0
  %926 = vmatprep.subr.mxu0 0.0
  %927 = vmatpush1.msra.mxu0 0.0
  %928 = vmatprep.subr.mxu0 0.0
  %929 = vmatpush1.msra.mxu0 0.0
  %930 = vmatprep.subr.mxu0 0.0
  %931 = vmatpush1.msra.mxu0 0.0
  %932 = vmatprep.subr.mxu0 0.0
  %933 = vmatpush1.msra.mxu0 0.0
  %934 = vmatprep.subr.mxu0 0.0
  %935 = vmatpush1.msra.mxu0 0.0
  %936 = vmatprep.subr.mxu0 0.0
  %937 = vmatpush1.msra.mxu0 0.0
  %938 = vmatprep.subr.mxu0 0.0
  %939 = vmatpush1.msra.mxu0 0.0
  %940 = vmatprep.subr.mxu0 0.0
  %941 = vmatpush1.msra.mxu0 0.0
  %942 = vmatprep.subr.mxu0 0.0
  %943 = vmatpush1.msra.mxu0 0.0
  %944 = vmatprep.subr.mxu0 0.0
  %945 = vmatpush1.msra.mxu0 0.0
  %946 = vmatprep.subr.mxu0 0.0
  %947 = vmatpush1.msra.mxu0 0.0
  %948 = vmatprep.subr.mxu0 0.0
  %949 = vmatpush1.msra.mxu0 0.0
  %950 = vmatprep.subr.mxu0 0.0
  %951 = vmatpush1.msra.mxu0 0.0
  %952 = vmatprep.subr.mxu0 0.0
  %953 = vmatpush1.msra.mxu0 0.0
  %954 = vmatprep.subr.mxu0 0.0
  %955 = vmatpush1.msra.mxu0 0.0
  %956 = vmatprep.subr.mxu0 0.0
  %957 = vmatpush1.msra.mxu0 0.0
  %958 = vmatprep.mubr.f32.mxu0 0.0
  %959 = vmatmul.mubr.f32.gmra.mrb[0].mxu0 %v892
  %v960 = vpop.f32.mrb[0].mxu0
  %v961 = vadd.f32 0.0, %v960
  %v962 = vpop.f32.mrb[0].mxu0
  %963 = vdwg.mxu0
  %v964 = vadd.f32 %v883, %v961
  %s965 = scalar_lea.vmem %s11, 64
  %v966 = vld [vmem:[%s965] sm:$0xff]
  %v967 = vld [vmem:[%s965 + $0x8] sm:$0xff]
  %v968 = vld [vmem:[%s965 + $0x10] sm:$0xff]
  %v969 = vld [vmem:[%s965 + $0x18] sm:$0xff]
  %v971 = vsel %vm237, %v729, 0
  %973 = vmatprep.subr.mxu0 0.0
  %974 = vmatpush1.msra.mxu0 %v966
  %975 = vmatprep.subr.mxu0 0.0
  %976 = vmatpush1.msra.mxu0 %v967
  %977 = vmatprep.subr.mxu0 0.0
  %978 = vmatpush1.msra.mxu0 %v968
  %979 = vmatprep.subr.mxu0 0.0
  %980 = vmatpush1.msra.mxu0 %v969
  %981 = vmatprep.subr.mxu0 0.0
  %982 = vmatpush1.msra.mxu0 0.0
  %983 = vmatprep.subr.mxu0 0.0
  %984 = vmatpush1.msra.mxu0 0.0
  %985 = vmatprep.subr.mxu0 0.0
  %986 = vmatpush1.msra.mxu0 0.0
  %987 = vmatprep.subr.mxu0 0.0
  %988 = vmatpush1.msra.mxu0 0.0
  %989 = vmatprep.subr.mxu0 0.0
  %990 = vmatpush1.msra.mxu0 0.0
  %991 = vmatprep.subr.mxu0 0.0
  %992 = vmatpush1.msra.mxu0 0.0
  %993 = vmatprep.subr.mxu0 0.0
  %994 = vmatpush1.msra.mxu0 0.0
  %995 = vmatprep.subr.mxu0 0.0
  %996 = vmatpush1.msra.mxu0 0.0
  %997 = vmatprep.subr.mxu0 0.0
  %998 = vmatpush1.msra.mxu0 0.0
  %999 = vmatprep.subr.mxu0 0.0
  %1000 = vmatpush1.msra.mxu0 0.0
  %1001 = vmatprep.subr.mxu0 0.0
  %1002 = vmatpush1.msra.mxu0 0.0
  %1003 = vmatprep.subr.mxu0 0.0
  %1004 = vmatpush1.msra.mxu0 0.0
  %1005 = vmatprep.subr.mxu0 0.0
  %1006 = vmatpush1.msra.mxu0 0.0
  %1007 = vmatprep.subr.mxu0 0.0
  %1008 = vmatpush1.msra.mxu0 0.0
  %1009 = vmatprep.subr.mxu0 0.0
  %1010 = vmatpush1.msra.mxu0 0.0
  %1011 = vmatprep.subr.mxu0 0.0
  %1012 = vmatpush1.msra.mxu0 0.0
  %1013 = vmatprep.subr.mxu0 0.0
  %1014 = vmatpush1.msra.mxu0 0.0
  %1015 = vmatprep.subr.mxu0 0.0
  %1016 = vmatpush1.msra.mxu0 0.0
  %1017 = vmatprep.subr.mxu0 0.0
  %1018 = vmatpush1.msra.mxu0 0.0
  %1019 = vmatprep.subr.mxu0 0.0
  %1020 = vmatpush1.msra.mxu0 0.0
  %1021 = vmatprep.subr.mxu0 0.0
  %1022 = vmatpush1.msra.mxu0 0.0
  %1023 = vmatprep.subr.mxu0 0.0
  %1024 = vmatpush1.msra.mxu0 0.0
  %1025 = vmatprep.subr.mxu0 0.0
  %1026 = vmatpush1.msra.mxu0 0.0
  %1027 = vmatprep.subr.mxu0 0.0
  %1028 = vmatpush1.msra.mxu0 0.0
  %1029 = vmatprep.subr.mxu0 0.0
  %1030 = vmatpush1.msra.mxu0 0.0
  %1031 = vmatprep.subr.mxu0 0.0
  %1032 = vmatpush1.msra.mxu0 0.0
  %1033 = vmatprep.subr.mxu0 0.0
  %1034 = vmatpush1.msra.mxu0 0.0
  %1035 = vmatprep.subr.mxu0 0.0
  %1036 = vmatpush1.msra.mxu0 0.0
  %1037 = vmatprep.mubr.f32.mxu0 0.0
  %1038 = vmatmul.mubr.f32.gmra.mrb[0].mxu0 %v971
  %v1039 = vpop.f32.mrb[0].mxu0
  %v1040 = vadd.f32 0.0, %v1039
  %v1041 = vpop.f32.mrb[0].mxu0
  %1042 = vdwg.mxu0
  %v1043 = vadd.f32 %v964, %v1040
  %v1044 = vmax.f32 %v1043, 0.0
  %1045 = vmatprep.subr.mxu0 0.0
  %1046 = vmatpush1.msra.mxu0 %v1044
  %1047 = vmatprep.subr.mxu0 0.0
  %1048 = vmatpush1.msra.mxu0 0.0
  %1049 = vmatprep.subr.mxu0 0.0
  %1050 = vmatpush1.msra.mxu0 0.0
  %1051 = vmatprep.subr.mxu0 0.0
  %1052 = vmatpush1.msra.mxu0 0.0
  %1053 = vmatprep.subr.mxu0 0.0
  %1054 = vmatpush1.msra.mxu0 0.0
  %1055 = vmatprep.subr.mxu0 0.0
  %1056 = vmatpush1.msra.mxu0 0.0
  %1057 = vmatprep.subr.mxu0 0.0
  %1058 = vmatpush1.msra.mxu0 0.0
  %1059 = vmatprep.subr.mxu0 0.0
  %1060 = vmatpush1.msra.mxu0 0.0
  %1061 = vmatprep.subr.mxu0 0.0
  %1062 = vmatpush1.msra.mxu0 0.0
  %1063 = vmatprep.subr.mxu0 0.0
  %1064 = vmatpush1.msra.mxu0 0.0
  %1065 = vmatprep.subr.mxu0 0.0
  %1066 = vmatpush1.msra.mxu0 0.0
  %1067 = vmatprep.subr.mxu0 0.0
  %1068 = vmatpush1.msra.mxu0 0.0
  %1069 = vmatprep.subr.mxu0 0.0
  %1070 = vmatpush1.msra.mxu0 0.0
  %1071 = vmatprep.subr.mxu0 0.0
  %1072 = vmatpush1.msra.mxu0 0.0
  %1073 = vmatprep.subr.mxu0 0.0
  %1074 = vmatpush1.msra.mxu0 0.0
  %1075 = vmatprep.subr.mxu0 0.0
  %1076 = vmatpush1.msra.mxu0 0.0
  %1077 = vmatprep.subr.mxu0 0.0
  %1078 = vmatpush1.msra.mxu0 0.0
  %1079 = vmatprep.subr.mxu0 0.0
  %1080 = vmatpush1.msra.mxu0 0.0
  %1081 = vmatprep.subr.mxu0 0.0
  %1082 = vmatpush1.msra.mxu0 0.0
  %1083 = vmatprep.subr.mxu0 0.0
  %1084 = vmatpush1.msra.mxu0 0.0
  %1085 = vmatprep.subr.mxu0 0.0
  %1086 = vmatpush1.msra.mxu0 0.0
  %1087 = vmatprep.subr.mxu0 0.0
  %1088 = vmatpush1.msra.mxu0 0.0
  %1089 = vmatprep.subr.mxu0 0.0
  %1090 = vmatpush1.msra.mxu0 0.0
  %1091 = vmatprep.subr.mxu0 0.0
  %1092 = vmatpush1.msra.mxu0 0.0
  %1093 = vmatprep.subr.mxu0 0.0
  %1094 = vmatpush1.msra.mxu0 0.0
  %1095 = vmatprep.subr.mxu0 0.0
  %1096 = vmatpush1.msra.mxu0 0.0
  %1097 = vmatprep.subr.mxu0 0.0
  %1098 = vmatpush1.msra.mxu0 0.0
  %1099 = vmatprep.subr.mxu0 0.0
  %1100 = vmatpush1.msra.mxu0 0.0
  %1101 = vmatprep.subr.mxu0 0.0
  %1102 = vmatpush1.msra.mxu0 0.0
  %1103 = vmatprep.subr.mxu0 0.0
  %1104 = vmatpush1.msra.mxu0 0.0
  %1105 = vmatprep.subr.mxu0 0.0
  %1106 = vmatpush1.msra.mxu0 0.0
  %1107 = vmatprep.subr.mxu0 0.0
  %1108 = vmatpush1.msra.mxu0 0.0
  %1109 = vmatprep.mubr.f32.mxu0 0.0
  %1110 = vmatmul.mubr.f32.gmra.mrb[0].mxu0 %v644
  %v1111 = vpop.f32.mrb[0].mxu0
  %v1112 = vadd.f32 0.0, %v1111
  %v1113 = vpop.f32.mrb[0].mxu0
  %1114 = vmatprep.mubr.f32.mxu0 0.0
  %1115 = vmatmul.mubr.f32.gmra.mrb[0].mxu0 %v647
  %v1116 = vpop.f32.mrb[0].mxu0
  %v1117 = vadd.f32 0.0, %v1116
  %v1118 = vpop.f32.mrb[0].mxu0
  %1119 = vmatprep.mubr.f32.mxu0 0.0
  %1120 = vmatmul.mubr.f32.gmra.mrb[0].mxu0 %v650
  %v1121 = vpop.f32.mrb[0].mxu0
  %v1122 = vadd.f32 0.0, %v1121
  %v1123 = vpop.f32.mrb[0].mxu0
  %1124 = vdwg.mxu0
  %v1125 = vld [vmem:[%s14] sm:$0xff]
  %v1126 = vld [vmem:[%s13] sm:$0xff]
  %v1128 = vsel %vm642, %v1112, 0
  %1130 = vmatprep.subr.mxu0 0.0
  %1131 = vmatpush1.msra.mxu0 %v1126
  %1132 = vmatprep.subr.mxu0 0.0
  %1133 = vmatpush1.msra.mxu0 0.0
  %1134 = vmatprep.subr.mxu0 0.0
  %1135 = vmatpush1.msra.mxu0 0.0
  %1136 = vmatprep.subr.mxu0 0.0
  %1137 = vmatpush1.msra.mxu0 0.0
  %1138 = vmatprep.subr.mxu0 0.0
  %1139 = vmatpush1.msra.mxu0 0.0
  %1140 = vmatprep.subr.mxu0 0.0
  %1141 = vmatpush1.msra.mxu0 0.0
  %1142 = vmatprep.subr.mxu0 0.0
  %1143 = vmatpush1.msra.mxu0 0.0
  %1144 = vmatprep.subr.mxu0 0.0
  %1145 = vmatpush1.msra.mxu0 0.0
  %1146 = vmatprep.subr.mxu0 0.0
  %1147 = vmatpush1.msra.mxu0 0.0
  %1148 = vmatprep.subr.mxu0 0.0
  %1149 = vmatpush1.msra.mxu0 0.0
  %1150 = vmatprep.subr.mxu0 0.0
  %1151 = vmatpush1.msra.mxu0 0.0
  %1152 = vmatprep.subr.mxu0 0.0
  %1153 = vmatpush1.msra.mxu0 0.0
  %1154 = vmatprep.subr.mxu0 0.0
  %1155 = vmatpush1.msra.mxu0 0.0
  %1156 = vmatprep.subr.mxu0 0.0
  %1157 = vmatpush1.msra.mxu0 0.0
  %1158 = vmatprep.subr.mxu0 0.0
  %1159 = vmatpush1.msra.mxu0 0.0
  %1160 = vmatprep.subr.mxu0 0.0
  %1161 = vmatpush1.msra.mxu0 0.0
  %1162 = vmatprep.subr.mxu0 0.0
  %1163 = vmatpush1.msra.mxu0 0.0
  %1164 = vmatprep.subr.mxu0 0.0
  %1165 = vmatpush1.msra.mxu0 0.0
  %1166 = vmatprep.subr.mxu0 0.0
  %1167 = vmatpush1.msra.mxu0 0.0
  %1168 = vmatprep.subr.mxu0 0.0
  %1169 = vmatpush1.msra.mxu0 0.0
  %1170 = vmatprep.subr.mxu0 0.0
  %1171 = vmatpush1.msra.mxu0 0.0
  %1172 = vmatprep.subr.mxu0 0.0
  %1173 = vmatpush1.msra.mxu0 0.0
  %1174 = vmatprep.subr.mxu0 0.0
  %1175 = vmatpush1.msra.mxu0 0.0
  %1176 = vmatprep.subr.mxu0 0.0
  %1177 = vmatpush1.msra.mxu0 0.0
  %1178 = vmatprep.subr.mxu0 0.0
  %1179 = vmatpush1.msra.mxu0 0.0
  %1180 = vmatprep.subr.mxu0 0.0
  %1181 = vmatpush1.msra.mxu0 0.0
  %1182 = vmatprep.subr.mxu0 0.0
  %1183 = vmatpush1.msra.mxu0 0.0
  %1184 = vmatprep.subr.mxu0 0.0
  %1185 = vmatpush1.msra.mxu0 0.0
  %1186 = vmatprep.subr.mxu0 0.0
  %1187 = vmatpush1.msra.mxu0 0.0
  %1188 = vmatprep.subr.mxu0 0.0
  %1189 = vmatpush1.msra.mxu0 0.0
  %1190 = vmatprep.subr.mxu0 0.0
  %1191 = vmatpush1.msra.mxu0 0.0
  %1192 = vmatprep.subr.mxu0 0.0
  %1193 = vmatpush1.msra.mxu0 0.0
  %1194 = vmatprep.mubr.f32.mxu0 0.0
  %1195 = vmatmul.mubr.f32.gmra.mrb[0].mxu0 %v1128
  %v1196 = vpop.f32.mrb[0].mxu0
  %v1197 = vadd.f32 0.0, %v1196
  %v1198 = vpop.f32.mrb[0].mxu0
  %1199 = vdwg.mxu0
  %v1201 = vsel %vm642, %v1044, 0
  %1203 = vmatprep.subr.mxu0 0.0
  %1204 = vmatpush1.msra.mxu0 %v1125
  %1205 = vmatprep.subr.mxu0 0.0
  %1206 = vmatpush1.msra.mxu0 0.0
  %1207 = vmatprep.subr.mxu0 0.0
  %1208 = vmatpush1.msra.mxu0 0.0
  %1209 = vmatprep.subr.mxu0 0.0
  %1210 = vmatpush1.msra.mxu0 0.0
  %1211 = vmatprep.subr.mxu0 0.0
  %1212 = vmatpush1.msra.mxu0 0.0
  %1213 = vmatprep.subr.mxu0 0.0
  %1214 = vmatpush1.msra.mxu0 0.0
  %1215 = vmatprep.subr.mxu0 0.0
  %1216 = vmatpush1.msra.mxu0 0.0
  %1217 = vmatprep.subr.mxu0 0.0
  %1218 = vmatpush1.msra.mxu0 0.0
  %1219 = vmatprep.subr.mxu0 0.0
  %1220 = vmatpush1.msra.mxu0 0.0
  %1221 = vmatprep.subr.mxu0 0.0
  %1222 = vmatpush1.msra.mxu0 0.0
  %1223 = vmatprep.subr.mxu0 0.0
  %1224 = vmatpush1.msra.mxu0 0.0
  %1225 = vmatprep.subr.mxu0 0.0
  %1226 = vmatpush1.msra.mxu0 0.0
  %1227 = vmatprep.subr.mxu0 0.0
  %1228 = vmatpush1.msra.mxu0 0.0
  %1229 = vmatprep.subr.mxu0 0.0
  %1230 = vmatpush1.msra.mxu0 0.0
  %1231 = vmatprep.subr.mxu0 0.0
  %1232 = vmatpush1.msra.mxu0 0.0
  %1233 = vmatprep.subr.mxu0 0.0
  %1234 = vmatpush1.msra.mxu0 0.0
  %1235 = vmatprep.subr.mxu0 0.0
  %1236 = vmatpush1.msra.mxu0 0.0
  %1237 = vmatprep.subr.mxu0 0.0
  %1238 = vmatpush1.msra.mxu0 0.0
  %1239 = vmatprep.subr.mxu0 0.0
  %1240 = vmatpush1.msra.mxu0 0.0
  %1241 = vmatprep.subr.mxu0 0.0
  %1242 = vmatpush1.msra.mxu0 0.0
  %1243 = vmatprep.subr.mxu0 0.0
  %1244 = vmatpush1.msra.mxu0 0.0
  %1245 = vmatprep.subr.mxu0 0.0
  %1246 = vmatpush1.msra.mxu0 0.0
  %1247 = vmatprep.subr.mxu0 0.0
  %1248 = vmatpush1.msra.mxu0 0.0
  %1249 = vmatprep.subr.mxu0 0.0
  %1250 = vmatpush1.msra.mxu0 0.0
  %1251 = vmatprep.subr.mxu0 0.0
  %1252 = vmatpush1.msra.mxu0 0.0
  %1253 = vmatprep.subr.mxu0 0.0
  %1254 = vmatpush1.msra.mxu0 0.0
  %1255 = vmatprep.subr.mxu0 0.0
  %1256 = vmatpush1.msra.mxu0 0.0
  %1257 = vmatprep.subr.mxu0 0.0
  %1258 = vmatpush1.msra.mxu0 0.0
  %1259 = vmatprep.subr.mxu0 0.0
  %1260 = vmatpush1.msra.mxu0 0.0
  %1261 = vmatprep.subr.mxu0 0.0
  %1262 = vmatpush1.msra.mxu0 0.0
  %1263 = vmatprep.subr.mxu0 0.0
  %1264 = vmatpush1.msra.mxu0 0.0
  %1265 = vmatprep.subr.mxu0 0.0
  %1266 = vmatpush1.msra.mxu0 0.0
  %1267 = vmatprep.mubr.f32.mxu0 0.0
  %1268 = vmatmul.mubr.f32.gmra.mrb[0].mxu0 %v1201
  %v1269 = vpop.f32.mrb[0].mxu0
  %v1270 = vadd.f32 %v1197, %v1269
  %v1271 = vpop.f32.mrb[0].mxu0
  %1272 = vdwg.mxu0
  %s1273 = scalar_lea.vmem %s13, 8
  %v1274 = vld [vmem:[%s1273] sm:$0xff]
  %v1276 = vsel %vm642, %v1117, 0
  %1278 = vmatprep.subr.mxu0 0.0
  %1279 = vmatpush1.msra.mxu0 %v1274
  %1280 = vmatprep.subr.mxu0 0.0
  %1281 = vmatpush1.msra.mxu0 0.0
  %1282 = vmatprep.subr.mxu0 0.0
  %1283 = vmatpush1.msra.mxu0 0.0
  %1284 = vmatprep.subr.mxu0 0.0
  %1285 = vmatpush1.msra.mxu0 0.0
  %1286 = vmatprep.subr.mxu0 0.0
  %1287 = vmatpush1.msra.mxu0 0.0
  %1288 = vmatprep.subr.mxu0 0.0
  %1289 = vmatpush1.msra.mxu0 0.0
  %1290 = vmatprep.subr.mxu0 0.0
  %1291 = vmatpush1.msra.mxu0 0.0
  %1292 = vmatprep.subr.mxu0 0.0
  %1293 = vmatpush1.msra.mxu0 0.0
  %1294 = vmatprep.subr.mxu0 0.0
  %1295 = vmatpush1.msra.mxu0 0.0
  %1296 = vmatprep.subr.mxu0 0.0
  %1297 = vmatpush1.msra.mxu0 0.0
  %1298 = vmatprep.subr.mxu0 0.0
  %1299 = vmatpush1.msra.mxu0 0.0
  %1300 = vmatprep.subr.mxu0 0.0
  %1301 = vmatpush1.msra.mxu0 0.0
  %1302 = vmatprep.subr.mxu0 0.0
  %1303 = vmatpush1.msra.mxu0 0.0
  %1304 = vmatprep.subr.mxu0 0.0
  %1305 = vmatpush1.msra.mxu0 0.0
  %1306 = vmatprep.subr.mxu0 0.0
  %1307 = vmatpush1.msra.mxu0 0.0
  %1308 = vmatprep.subr.mxu0 0.0
  %1309 = vmatpush1.msra.mxu0 0.0
  %1310 = vmatprep.subr.mxu0 0.0
  %1311 = vmatpush1.msra.mxu0 0.0
  %1312 = vmatprep.subr.mxu0 0.0
  %1313 = vmatpush1.msra.mxu0 0.0
  %1314 = vmatprep.subr.mxu0 0.0
  %1315 = vmatpush1.msra.mxu0 0.0
  %1316 = vmatprep.subr.mxu0 0.0
  %1317 = vmatpush1.msra.mxu0 0.0
  %1318 = vmatprep.subr.mxu0 0.0
  %1319 = vmatpush1.msra.mxu0 0.0
  %1320 = vmatprep.subr.mxu0 0.0
  %1321 = vmatpush1.msra.mxu0 0.0
  %1322 = vmatprep.subr.mxu0 0.0
  %1323 = vmatpush1.msra.mxu0 0.0
  %1324 = vmatprep.subr.mxu0 0.0
  %1325 = vmatpush1.msra.mxu0 0.0
  %1326 = vmatprep.subr.mxu0 0.0
  %1327 = vmatpush1.msra.mxu0 0.0
  %1328 = vmatprep.subr.mxu0 0.0
  %1329 = vmatpush1.msra.mxu0 0.0
  %1330 = vmatprep.subr.mxu0 0.0
  %1331 = vmatpush1.msra.mxu0 0.0
  %1332 = vmatprep.subr.mxu0 0.0
  %1333 = vmatpush1.msra.mxu0 0.0
  %1334 = vmatprep.subr.mxu0 0.0
  %1335 = vmatpush1.msra.mxu0 0.0
  %1336 = vmatprep.subr.mxu0 0.0
  %1337 = vmatpush1.msra.mxu0 0.0
  %1338 = vmatprep.subr.mxu0 0.0
  %1339 = vmatpush1.msra.mxu0 0.0
  %1340 = vmatprep.subr.mxu0 0.0
  %1341 = vmatpush1.msra.mxu0 0.0
  %1342 = vmatprep.mubr.f32.mxu0 0.0
  %1343 = vmatmul.mubr.f32.gmra.mrb[0].mxu0 %v1276
  %v1344 = vpop.f32.mrb[0].mxu0
  %v1345 = vadd.f32 0.0, %v1344
  %v1346 = vpop.f32.mrb[0].mxu0
  %1347 = vdwg.mxu0
  %v1348 = vadd.f32 %v1270, %v1345
  %s1349 = scalar_lea.vmem %s13, 16
  %v1350 = vld [vmem:[%s1349] sm:$0xff]
  %v1352 = vsel %vm642, %v1122, 0
  %1354 = vmatprep.subr.mxu0 0.0
  %1355 = vmatpush1.msra.mxu0 %v1350
  %1356 = vmatprep.subr.mxu0 0.0
  %1357 = vmatpush1.msra.mxu0 0.0
  %1358 = vmatprep.subr.mxu0 0.0
  %1359 = vmatpush1.msra.mxu0 0.0
  %1360 = vmatprep.subr.mxu0 0.0
  %1361 = vmatpush1.msra.mxu0 0.0
  %1362 = vmatprep.subr.mxu0 0.0
  %1363 = vmatpush1.msra.mxu0 0.0
  %1364 = vmatprep.subr.mxu0 0.0
  %1365 = vmatpush1.msra.mxu0 0.0
  %1366 = vmatprep.subr.mxu0 0.0
  %1367 = vmatpush1.msra.mxu0 0.0
  %1368 = vmatprep.subr.mxu0 0.0
  %1369 = vmatpush1.msra.mxu0 0.0
  %1370 = vmatprep.subr.mxu0 0.0
  %1371 = vmatpush1.msra.mxu0 0.0
  %1372 = vmatprep.subr.mxu0 0.0
  %1373 = vmatpush1.msra.mxu0 0.0
  %1374 = vmatprep.subr.mxu0 0.0
  %1375 = vmatpush1.msra.mxu0 0.0
  %1376 = vmatprep.subr.mxu0 0.0
  %1377 = vmatpush1.msra.mxu0 0.0
  %1378 = vmatprep.subr.mxu0 0.0
  %1379 = vmatpush1.msra.mxu0 0.0
  %1380 = vmatprep.subr.mxu0 0.0
  %1381 = vmatpush1.msra.mxu0 0.0
  %1382 = vmatprep.subr.mxu0 0.0
  %1383 = vmatpush1.msra.mxu0 0.0
  %1384 = vmatprep.subr.mxu0 0.0
  %1385 = vmatpush1.msra.mxu0 0.0
  %1386 = vmatprep.subr.mxu0 0.0
  %1387 = vmatpush1.msra.mxu0 0.0
  %1388 = vmatprep.subr.mxu0 0.0
  %1389 = vmatpush1.msra.mxu0 0.0
  %1390 = vmatprep.subr.mxu0 0.0
  %1391 = vmatpush1.msra.mxu0 0.0
  %1392 = vmatprep.subr.mxu0 0.0
  %1393 = vmatpush1.msra.mxu0 0.0
  %1394 = vmatprep.subr.mxu0 0.0
  %1395 = vmatpush1.msra.mxu0 0.0
  %1396 = vmatprep.subr.mxu0 0.0
  %1397 = vmatpush1.msra.mxu0 0.0
  %1398 = vmatprep.subr.mxu0 0.0
  %1399 = vmatpush1.msra.mxu0 0.0
  %1400 = vmatprep.subr.mxu0 0.0
  %1401 = vmatpush1.msra.mxu0 0.0
  %1402 = vmatprep.subr.mxu0 0.0
  %1403 = vmatpush1.msra.mxu0 0.0
  %1404 = vmatprep.subr.mxu0 0.0
  %1405 = vmatpush1.msra.mxu0 0.0
  %1406 = vmatprep.subr.mxu0 0.0
  %1407 = vmatpush1.msra.mxu0 0.0
  %1408 = vmatprep.subr.mxu0 0.0
  %1409 = vmatpush1.msra.mxu0 0.0
  %1410 = vmatprep.subr.mxu0 0.0
  %1411 = vmatpush1.msra.mxu0 0.0
  %1412 = vmatprep.subr.mxu0 0.0
  %1413 = vmatpush1.msra.mxu0 0.0
  %1414 = vmatprep.subr.mxu0 0.0
  %1415 = vmatpush1.msra.mxu0 0.0
  %1416 = vmatprep.subr.mxu0 0.0
  %1417 = vmatpush1.msra.mxu0 0.0
  %1418 = vmatprep.mubr.f32.mxu0 0.0
  %1419 = vmatmul.mubr.f32.gmra.mrb[0].mxu0 %v1352
  %v1420 = vpop.f32.mrb[0].mxu0
  %v1421 = vadd.f32 0.0, %v1420
  %v1422 = vpop.f32.mrb[0].mxu0
  %1423 = vdwg.mxu0
  %v1424 = vadd.f32 %v1348, %v1421
  %1425 = vst [vmem:[%s15] sm:$0xff] %v1424
  // Predicated region
  $region62: #{fm_encoder_forward.1} parent=0 // pred_check
    _
  $region63: #{fm_encoder_forward.1} parent=0 // pred_check_branch
    %1427 = sbr.rel (0) target = $region65
  $region64: #{fm_encoder_forward.1} parent=0 // pred_region
    _
  $region65: #{fm_encoder_forward.1} parent=0 // pred_fallthru
    _
  // Predicated region
  $region66: #{fm_encoder_forward.1} parent=0 // pred_check
    _
  $region67: #{fm_encoder_forward.1} parent=0 // pred_check_branch
    %1429 = sbr.rel (0) target = $region69
  $region68: #{fm_encoder_forward.1} parent=0 // pred_region
    _
  $region69: #{fm_encoder_forward.1} parent=0 // pred_fallthru
    _

</llo_original>
